<compile_context>
chip_gen: v7x
topology: tpu7x:2x2x1
jax: 0.10.0
libtpu: 0.0.40
codegen_flags: <defaults>
</compile_context>

<pallas_src>
import functools

import jax
import jax.numpy as jnp
from jax.experimental import pallas as pl
from jax.experimental.pallas import tpu as pltpu


def _encoder_gru_chunk_kernel(x_ref,     # (U, E)    pre-gathered embedding chunk
                              wih_ref,   # (E, 3Hp)  resident, gates lane-aligned [r|z|n]
                              whh_ref,   # (Hp, 3Hp) resident
                              ba_ref,    # (1, 3Hp)  folded bias [b_ir+b_hr | b_iz+b_hz | b_in]
                              bhn_ref,   # (1, Hp)   b_hn (kept separate: multiplied by r)
                              h0_ref,    # (1, Hp)   initial hidden (padded)
                              out_ref,   # (U, Hp)   output chunk
                              h_ref,     # VMEM scratch (1, Hp): hidden carried across chunks
                              gx_ref):   # VMEM scratch (U, 3Hp): hoisted input projection
    c = pl.program_id(0)
    U, Hp = out_ref.shape

    @pl.when(c == 0)
    def _():
        h_ref[...] = h0_ref[...]

    # ---- hoisted input projection: one batched matmul per chunk (off the serial path) ----
    x = x_ref[...].astype(wih_ref.dtype)
    gx_ref[...] = (jnp.dot(x, wih_ref[...], preferred_element_type=jnp.float32)
                   + ba_ref[...])

    whh = whh_ref[...]          # loaded once per chunk, reused in every step
    bhn = bhn_ref[...]
    wdt = whh.dtype

    def step(u, h):
        # hidden-side projection: the only matmul on the serial critical path
        gh = jnp.dot(h.astype(wdt), whh, preferred_element_type=jnp.float32)   # (1, 3Hp)
        gx = gx_ref[pl.ds(u, 1), :]                                            # (1, 3Hp)
        # PyTorch nn.GRU equations, gate order [r, z, n]; slices are lane-aligned.
        r = jax.nn.sigmoid(gx[:, 0 * Hp:1 * Hp] + gh[:, 0 * Hp:1 * Hp])
        z = jax.nn.sigmoid(gx[:, 1 * Hp:2 * Hp] + gh[:, 1 * Hp:2 * Hp])
        n = jnp.tanh(gx[:, 2 * Hp:3 * Hp] + r * (gh[:, 2 * Hp:3 * Hp] + bhn))
        h_new = (1.0 - z) * n + z * h
        out_ref[pl.ds(u, 1), :] = h_new.astype(out_ref.dtype)
        return h_new

    h_ref[...] = jax.lax.fori_loop(0, U, step, h_ref[...], unroll=True)


def _pad_gate_cols(w_t, H, Hp):
    """(K, 3H) -> (K, 3Hp): place each gate block at lane offset g*Hp, zero-pad rest."""
    K = w_t.shape[0]
    out = jnp.zeros((K, 3 * Hp), jnp.float32)
    for g in range(3):
        out = out.at[:, g * Hp:g * Hp + H].set(w_t[:, g * H:(g + 1) * H])
    return out


def _round_up(x, m):
    return (x + m - 1) // m * m


@functools.partial(jax.jit, static_argnames=("weight_dtype",))
def encoder_rnn_forward(tokens, hidden, params, weight_dtype=jnp.float32):
    """Pallas equivalent of running EncoderRNN.forward over `tokens` sequentially.

    tokens : (T,) int32 token ids (T=1 reproduces the PyTorch single-step forward)
    hidden : (1, 1, H) float32 initial hidden state
    params : dict with PyTorch-shaped embedding / GRU weights
    Returns (output, hidden): output (T, 1, H), hidden (1, 1, H).
    """
    emb = params["embedding"]                     # (vocab, E)
    vocab, E = emb.shape
    H = hidden.shape[-1]
    Hp = _round_up(H, 128)                        # lane-aligned gate width
    T = tokens.shape[0]

    # Chunk U timesteps per grid step (multiple of 8 for the sublane constraint).
    U = min(32, _round_up(T, 8))
    Tp = _round_up(T, U)
    n_chunks = Tp // U

    # ---- trace-time parameter repacking (lane-aligned gates, folded biases) ----
    wih_p = _pad_gate_cols(params["weight_ih"].T, H, Hp).astype(weight_dtype)       # (E, 3Hp)
    whh_p = jnp.zeros((Hp, 3 * Hp), jnp.float32).at[:H].set(
        _pad_gate_cols(params["weight_hh"].T, H, Hp)).astype(weight_dtype)          # (Hp, 3Hp)

    b_ih, b_hh = params["bias_ih"], params["bias_hh"]
    b_all = jnp.zeros((1, 3 * Hp), jnp.float32)
    b_all = b_all.at[0, 0 * Hp:0 * Hp + H].set(b_ih[0 * H:1 * H] + b_hh[0 * H:1 * H])
    b_all = b_all.at[0, 1 * Hp:1 * Hp + H].set(b_ih[1 * H:2 * H] + b_hh[1 * H:2 * H])
    b_all = b_all.at[0, 2 * Hp:2 * Hp + H].set(b_ih[2 * H:3 * H])
    b_hn = jnp.zeros((1, Hp), jnp.float32).at[0, :H].set(b_hh[2 * H:3 * H])

    h0_p = jnp.zeros((1, Hp), jnp.float32).at[:, :H].set(hidden.reshape(1, H))

    # Pre-gather embeddings in the wrapper (XLA gather); kernel streams (U, E) chunks.
    # Out-of-range ids clamp into the table (documented semantics choice).
    tok_ids = jnp.clip(tokens.astype(jnp.int32), 0, vocab - 1)
    x_seq = emb[tok_ids].astype(jnp.float32)                      # (T, E)
    x_seq = jnp.pad(x_seq, ((0, Tp - T), (0, 0)))                 # (Tp, E)

    cost = pl.CostEstimate(
        flops=int(2 * Tp * (E + Hp) * 3 * Hp + 12 * Tp * Hp),
        transcendentals=int(3 * Tp * Hp),
        bytes_accessed=int(4 * (E * 3 * Hp + Hp * 3 * Hp + 4 * Hp + 3 * Hp
                                + Tp * E + Tp * Hp)),
    )

    const = lambda shape: pl.BlockSpec(shape, lambda c: (0,) * len(shape))

    out_p = pl.pallas_call(
        _encoder_gru_chunk_kernel,
        out_shape=jax.ShapeDtypeStruct((Tp, Hp), jnp.float32),
        grid_spec=pltpu.PrefetchScalarGridSpec(
            num_scalar_prefetch=0,
            grid=(n_chunks,),
            in_specs=[
                pl.BlockSpec((U, E), lambda c: (c, 0)),   # streamed embedding chunk
                const((E, 3 * Hp)),      # W_ih^T (resident, constant index)
                const((Hp, 3 * Hp)),     # W_hh^T (resident)
                const((1, 3 * Hp)),      # folded input/hidden biases
                const((1, Hp)),          # b_hn
                const((1, Hp)),          # h0
            ],
            out_specs=pl.BlockSpec((U, Hp), lambda c: (c, 0)),    # blocked along T
            scratch_shapes=[
                pltpu.VMEM((1, Hp), jnp.float32),        # carried hidden state
                pltpu.VMEM((U, 3 * Hp), jnp.float32),    # hoisted Gx for the chunk
            ],
        ),
        compiler_params=pltpu.CompilerParams(
            dimension_semantics=("arbitrary",)),          # sequential recurrence
        cost_estimate=cost,
    )(x_seq, wih_p, whh_p, b_all, b_hn, h0_p)

    output = out_p[:T, :H].reshape(T, 1, H)               # (seq, batch=1, H)
    hidden_out = out_p[T - 1, :H].reshape(1, 1, H)
    return output, hidden_out


def _reference_forward(tokens, hidden, params):
    """Pure-JAX reference: nn.Embedding + nn.GRU applied step-by-step."""
    H = hidden.shape[-1]
    dot = lambda a, b: jnp.dot(a, b, precision=jax.lax.Precision.HIGHEST)
    h = hidden.reshape(1, H)
    outs = []
    for tok in list(tokens):
        x = params["embedding"][tok].reshape(1, -1)
        gx = dot(x, params["weight_ih"].T) + params["bias_ih"]
        gh = dot(h, params["weight_hh"].T) + params["bias_hh"]
        r = jax.nn.sigmoid(gx[:, :H] + gh[:, :H])
        z = jax.nn.sigmoid(gx[:, H:2 * H] + gh[:, H:2 * H])
        n = jnp.tanh(gx[:, 2 * H:] + r * gh[:, 2 * H:])
        h = (1.0 - z) * n + z * h
        outs.append(h)
    return jnp.stack(outs, 0), h.reshape(1, 1, H)


def init_params(key, input_size, hidden_size, embedding_size):
    k_emb, k_wih, k_whh, k_bih, k_bhh = jax.random.split(key, 5)
    scale = 1.0 / jnp.sqrt(hidden_size)
    return {
        # PyTorch shapes: Embedding(input_size, E); GRU weight_ih_l0 (3H, E), weight_hh_l0 (3H, H)
        "embedding": jax.random.normal(k_emb, (input_size, embedding_size), jnp.float32),
        "weight_ih": jax.random.uniform(k_wih, (3 * hidden_size, embedding_size),
                                        jnp.float32, -scale, scale),
        "weight_hh": jax.random.uniform(k_whh, (3 * hidden_size, hidden_size),
                                        jnp.float32, -scale, scale),
        "bias_ih": jax.random.uniform(k_bih, (3 * hidden_size,), jnp.float32, -scale, scale),
        "bias_hh": jax.random.uniform(k_bhh, (3 * hidden_size,), jnp.float32, -scale, scale),
    }


if __name__ == "__main__":
    INPUT_SIZE = 16      # vocab size
    HIDDEN = 32
    EMBED = HIDDEN       # embedding_size == -1  ->  embedding_size = hidden_size
    SEQ = 8

    key = jax.random.PRNGKey(0)
    params = init_params(key, INPUT_SIZE, HIDDEN, EMBED)
    hidden0 = jnp.zeros((1, 1, HIDDEN), dtype=jnp.float32)   # EncoderRNN.initHidden()

    # (a) single-token call — exactly the PyTorch EncoderRNN.forward semantics.
    tok1 = jnp.array([5], dtype=jnp.int32)
    out1, hid1 = encoder_rnn_forward(tok1, hidden0, params)
    jax.block_until_ready((out1, hid1))
    ref_out1, ref_hid1 = _reference_forward(tok1, hidden0, params)
    assert out1.shape == (1, 1, HIDDEN) and hid1.shape == (1, 1, HIDDEN)
    assert jnp.allclose(out1, ref_out1, atol=1e-4, rtol=1e-4)
    assert jnp.allclose(hid1, ref_hid1, atol=1e-4, rtol=1e-4)

    # (b) short sequence — single chunk, fused in-kernel recurrence over SEQ tokens.
    toks = jax.random.randint(jax.random.PRNGKey(1), (SEQ,), 0, INPUT_SIZE, jnp.int32)
    outs, hids = encoder_rnn_forward(toks, hidden0, params)
    jax.block_until_ready((outs, hids))
    ref_outs, ref_hids = _reference_forward(toks, hidden0, params)
    assert outs.shape == (SEQ, 1, HIDDEN) and hids.shape == (1, 1, HIDDEN)
    assert jnp.allclose(outs, ref_outs, atol=1e-4, rtol=1e-4)
    assert jnp.allclose(hids, ref_hids, atol=1e-4, rtol=1e-4)

    # (c) longer sequence crossing chunk boundaries — hidden carried across grid steps.
    SEQ_LONG = 40
    toks_long = jax.random.randint(jax.random.PRNGKey(2), (SEQ_LONG,), 0, INPUT_SIZE,
                                   jnp.int32)
    outL, hidL = encoder_rnn_forward(toks_long, hidden0, params)
    jax.block_until_ready((outL, hidL))
    ref_outL, ref_hidL = _reference_forward(toks_long, hidden0, params)
    assert outL.shape == (SEQ_LONG, 1, HIDDEN) and hidL.shape == (1, 1, HIDDEN)
    assert jnp.allclose(outL, ref_outL, atol=5e-4, rtol=5e-4)
    assert jnp.allclose(hidL, ref_hidL, atol=5e-4, rtol=5e-4)

    # (d) bf16 resident weights (v7x VMEM/DMA optimization), f32 accumulation —
    #     smoke check with loose tolerance (bf16 weight rounding).
    outB, hidB = encoder_rnn_forward(toks, hidden0, params, weight_dtype=jnp.bfloat16)
    jax.block_until_ready((outB, hidB))
    assert jnp.allclose(outB, ref_outs, atol=1e-1, rtol=1e-1)
    assert jnp.allclose(hidB, ref_hids, atol=1e-1, rtol=1e-1)

    print("KERNEL_OK")
</pallas_src>

<mosaic_0001>
module attributes {stable_mosaic.version = 11 : i64} {
  func.func @_encoder_gru_chunk_kernel(%arg0: i32, %arg1: memref<8x32xf32, #tpu.memory_space<vmem>>, %arg2: memref<32x384xf32, #tpu.memory_space<vmem>>, %arg3: memref<128x384xf32, #tpu.memory_space<vmem>>, %arg4: memref<1x384xf32, #tpu.memory_space<vmem>>, %arg5: memref<1x128xf32, #tpu.memory_space<vmem>>, %arg6: memref<1x128xf32, #tpu.memory_space<vmem>>, %arg7: memref<8x128xf32, #tpu.memory_space<vmem>>, %arg8: memref<1x128xf32, #tpu.memory_space<vmem>>, %arg9: memref<8x384xf32, #tpu.memory_space<vmem>>) attributes {dimension_semantics = [#tpu.dimension_semantics<arbitrary>], iteration_bounds = array<i64: 1>, scalar_prefetch = 0 : i64, scratch_operands = 2 : i64, tpu.core_type = #tpu.core_type<tc>, window_params = [{transform_indices = @transform_0, window_bounds = array<i64: 8, 32>}, {pipeline_mode = #tpu.pipeline_mode<synchronous>, transform_indices = @transform_1, window_bounds = array<i64: 32, 384>}, {pipeline_mode = #tpu.pipeline_mode<synchronous>, transform_indices = @transform_2, window_bounds = array<i64: 128, 384>}, {pipeline_mode = #tpu.pipeline_mode<synchronous>, transform_indices = @transform_3, window_bounds = array<i64: 1, 384>}, {pipeline_mode = #tpu.pipeline_mode<synchronous>, transform_indices = @transform_4, window_bounds = array<i64: 1, 128>}, {pipeline_mode = #tpu.pipeline_mode<synchronous>, transform_indices = @transform_5, window_bounds = array<i64: 1, 128>}, {transform_indices = @transform_6, window_bounds = array<i64: 8, 128>}]} {
    %c0_i32 = arith.constant 0 : i32
    %0 = arith.cmpi eq, %arg0, %c0_i32 : i32
    %1 = arith.extui %0 : i1 to i32
    %c0_i32_0 = arith.constant 0 : i32
    %2 = arith.cmpi ne, %1, %c0_i32_0 : i32
    scf.if %2 {
      %c0_65 = arith.constant 0 : index
      %c0_66 = arith.constant 0 : index
      %270 = vector.load %arg6[%c0_65, %c0_66] : memref<1x128xf32, #tpu.memory_space<vmem>>, vector<1x128xf32>
      %c0_67 = arith.constant 0 : index
      %c0_68 = arith.constant 0 : index
      %271 = vector.load %arg8[%c0_67, %c0_68] : memref<1x128xf32, #tpu.memory_space<vmem>>, vector<1x128xf32>
      tpu.vector_store %arg8[%c0_67, %c0_68], %270 {strides = array<i32>} : memref<1x128xf32, #tpu.memory_space<vmem>>, vector<1x128xf32>,
    } else {
    }
    %c0 = arith.constant 0 : index
    %c0_1 = arith.constant 0 : index
    %3 = vector.load %arg1[%c0, %c0_1] : memref<8x32xf32, #tpu.memory_space<vmem>>, vector<8x32xf32>
    %c0_2 = arith.constant 0 : index
    %c0_3 = arith.constant 0 : index
    %4 = vector.load %arg2[%c0_2, %c0_3] : memref<32x384xf32, #tpu.memory_space<vmem>>, vector<32x384xf32>
    %cst = arith.constant dense<0.000000e+00> : vector<8x384xf32>
    %5 = tpu.matmul %3, %4, %cst {dimension_numbers = #tpu.dot_dimension_numbers<[1], [0], [0], [1], [0, 0, 1, 1], [], []>} : vector<8x32xf32>, vector<32x384xf32>, vector<8x384xf32> -> vector<8x384xf32>
    %c0_4 = arith.constant 0 : index
    %c0_5 = arith.constant 0 : index
    %6 = vector.load %arg4[%c0_4, %c0_5] : memref<1x384xf32, #tpu.memory_space<vmem>>, vector<1x384xf32>
    %7 = vector.broadcast %6 : vector<1x384xf32> to vector<8x384xf32>
    %8 = arith.addf %5, %7 : vector<8x384xf32>
    %c0_6 = arith.constant 0 : index
    %c0_7 = arith.constant 0 : index
    %9 = vector.load %arg9[%c0_6, %c0_7] : memref<8x384xf32, #tpu.memory_space<vmem>>, vector<8x384xf32>
    tpu.vector_store %arg9[%c0_6, %c0_7], %8 {strides = array<i32>} : memref<8x384xf32, #tpu.memory_space<vmem>>, vector<8x384xf32>,
    %c0_8 = arith.constant 0 : index
    %c0_9 = arith.constant 0 : index
    %10 = vector.load %arg3[%c0_8, %c0_9] : memref<128x384xf32, #tpu.memory_space<vmem>>, vector<128x384xf32>
    %c0_10 = arith.constant 0 : index
    %c0_11 = arith.constant 0 : index
    %11 = vector.load %arg5[%c0_10, %c0_11] : memref<1x128xf32, #tpu.memory_space<vmem>>, vector<1x128xf32>
    %c0_12 = arith.constant 0 : index
    %c0_13 = arith.constant 0 : index
    %12 = vector.load %arg8[%c0_12, %c0_13] : memref<1x128xf32, #tpu.memory_space<vmem>>, vector<1x128xf32>
    %c0_i32_14 = arith.constant 0 : i32
    %cst_15 = arith.constant dense<0.000000e+00> : vector<1x384xf32>
    %13 = tpu.matmul %12, %10, %cst_15 {dimension_numbers = #tpu.dot_dimension_numbers<[1], [0], [0], [1], [0, 0, 1, 1], [], []>} : vector<1x128xf32>, vector<128x384xf32>, vector<1x384xf32> -> vector<1x384xf32>
    %14 = arith.index_cast %c0_i32_14 : i32 to index
    %c0_16 = arith.constant 0 : index
    %15 = vector.load %arg9[%14, %c0_16] : memref<8x384xf32, #tpu.memory_space<vmem>>, vector<1x384xf32>
    %16 = vector.extract_strided_slice %15 {offsets = [0, 0], sizes = [1, 128], strides = [1, 1]} : vector<1x384xf32> to vector<1x128xf32>
    %17 = vector.extract_strided_slice %13 {offsets = [0, 0], sizes = [1, 128], strides = [1, 1]} : vector<1x384xf32> to vector<1x128xf32>
    %18 = arith.addf %16, %17 : vector<1x128xf32>
    %19 = arith.negf %18 : vector<1x128xf32>
    %20 = math.exp %19 : vector<1x128xf32>
    %cst_17 = arith.constant 1.000000e+00 : f32
    %21 = vector.broadcast %cst_17 : f32 to vector<1x128xf32>
    %22 = arith.addf %21, %20 : vector<1x128xf32>
    %23 = arith.divf %21, %22 : vector<1x128xf32>
    %24 = vector.extract_strided_slice %15 {offsets = [0, 128], sizes = [1, 128], strides = [1, 1]} : vector<1x384xf32> to vector<1x128xf32>
    %25 = vector.extract_strided_slice %13 {offsets = [0, 128], sizes = [1, 128], strides = [1, 1]} : vector<1x384xf32> to vector<1x128xf32>
    %26 = arith.addf %24, %25 : vector<1x128xf32>
    %27 = arith.negf %26 : vector<1x128xf32>
    %28 = math.exp %27 : vector<1x128xf32>
    %cst_18 = arith.constant 1.000000e+00 : f32
    %29 = vector.broadcast %cst_18 : f32 to vector<1x128xf32>
    %30 = arith.addf %29, %28 : vector<1x128xf32>
    %31 = arith.divf %29, %30 : vector<1x128xf32>
    %32 = vector.extract_strided_slice %15 {offsets = [0, 256], sizes = [1, 128], strides = [1, 1]} : vector<1x384xf32> to vector<1x128xf32>
    %33 = vector.extract_strided_slice %13 {offsets = [0, 256], sizes = [1, 128], strides = [1, 1]} : vector<1x384xf32> to vector<1x128xf32>
    %34 = arith.addf %33, %11 : vector<1x128xf32>
    %35 = arith.mulf %23, %34 : vector<1x128xf32>
    %36 = arith.addf %32, %35 : vector<1x128xf32>
    %37 = math.tanh %36 : vector<1x128xf32>
    %cst_19 = arith.constant 1.000000e+00 : f32
    %38 = vector.broadcast %cst_19 : f32 to vector<1x128xf32>
    %39 = arith.subf %38, %31 : vector<1x128xf32>
    %40 = arith.mulf %39, %37 : vector<1x128xf32>
    %41 = arith.mulf %31, %12 : vector<1x128xf32>
    %42 = arith.addf %40, %41 : vector<1x128xf32>
    %43 = arith.index_cast %c0_i32_14 : i32 to index
    %c0_20 = arith.constant 0 : index
    %44 = vector.load %arg7[%43, %c0_20] : memref<8x128xf32, #tpu.memory_space<vmem>>, vector<1x128xf32>
    tpu.vector_store %arg7[%43, %c0_20], %42 {strides = array<i32>} : memref<8x128xf32, #tpu.memory_space<vmem>>, vector<1x128xf32>,
    %c1_i32 = arith.constant 1 : i32
    %cst_21 = arith.constant dense<0.000000e+00> : vector<1x384xf32>
    %45 = tpu.matmul %42, %10, %cst_21 {dimension_numbers = #tpu.dot_dimension_numbers<[1], [0], [0], [1], [0, 0, 1, 1], [], []>} : vector<1x128xf32>, vector<128x384xf32>, vector<1x384xf32> -> vector<1x384xf32>
    %46 = arith.index_cast %c1_i32 : i32 to index
    %c0_22 = arith.constant 0 : index
    %47 = vector.load %arg9[%46, %c0_22] : memref<8x384xf32, #tpu.memory_space<vmem>>, vector<1x384xf32>
    %48 = vector.extract_strided_slice %47 {offsets = [0, 0], sizes = [1, 128], strides = [1, 1]} : vector<1x384xf32> to vector<1x128xf32>
    %49 = vector.extract_strided_slice %45 {offsets = [0, 0], sizes = [1, 128], strides = [1, 1]} : vector<1x384xf32> to vector<1x128xf32>
    %50 = arith.addf %48, %49 : vector<1x128xf32>
    %51 = arith.negf %50 : vector<1x128xf32>
    %52 = math.exp %51 : vector<1x128xf32>
    %cst_23 = arith.constant 1.000000e+00 : f32
    %53 = vector.broadcast %cst_23 : f32 to vector<1x128xf32>
    %54 = arith.addf %53, %52 : vector<1x128xf32>
    %55 = arith.divf %53, %54 : vector<1x128xf32>
    %56 = vector.extract_strided_slice %47 {offsets = [0, 128], sizes = [1, 128], strides = [1, 1]} : vector<1x384xf32> to vector<1x128xf32>
    %57 = vector.extract_strided_slice %45 {offsets = [0, 128], sizes = [1, 128], strides = [1, 1]} : vector<1x384xf32> to vector<1x128xf32>
    %58 = arith.addf %56, %57 : vector<1x128xf32>
    %59 = arith.negf %58 : vector<1x128xf32>
    %60 = math.exp %59 : vector<1x128xf32>
    %cst_24 = arith.constant 1.000000e+00 : f32
    %61 = vector.broadcast %cst_24 : f32 to vector<1x128xf32>
    %62 = arith.addf %61, %60 : vector<1x128xf32>
    %63 = arith.divf %61, %62 : vector<1x128xf32>
    %64 = vector.extract_strided_slice %47 {offsets = [0, 256], sizes = [1, 128], strides = [1, 1]} : vector<1x384xf32> to vector<1x128xf32>
    %65 = vector.extract_strided_slice %45 {offsets = [0, 256], sizes = [1, 128], strides = [1, 1]} : vector<1x384xf32> to vector<1x128xf32>
    %66 = arith.addf %65, %11 : vector<1x128xf32>
    %67 = arith.mulf %55, %66 : vector<1x128xf32>
    %68 = arith.addf %64, %67 : vector<1x128xf32>
    %69 = math.tanh %68 : vector<1x128xf32>
    %cst_25 = arith.constant 1.000000e+00 : f32
    %70 = vector.broadcast %cst_25 : f32 to vector<1x128xf32>
    %71 = arith.subf %70, %63 : vector<1x128xf32>
    %72 = arith.mulf %71, %69 : vector<1x128xf32>
    %73 = arith.mulf %63, %42 : vector<1x128xf32>
    %74 = arith.addf %72, %73 : vector<1x128xf32>
    %75 = arith.index_cast %c1_i32 : i32 to index
    %c0_26 = arith.constant 0 : index
    %76 = vector.load %arg7[%75, %c0_26] : memref<8x128xf32, #tpu.memory_space<vmem>>, vector<1x128xf32>
    tpu.vector_store %arg7[%75, %c0_26], %74 {strides = array<i32>} : memref<8x128xf32, #tpu.memory_space<vmem>>, vector<1x128xf32>,
    %c2_i32 = arith.constant 2 : i32
    %cst_27 = arith.constant dense<0.000000e+00> : vector<1x384xf32>
    %77 = tpu.matmul %74, %10, %cst_27 {dimension_numbers = #tpu.dot_dimension_numbers<[1], [0], [0], [1], [0, 0, 1, 1], [], []>} : vector<1x128xf32>, vector<128x384xf32>, vector<1x384xf32> -> vector<1x384xf32>
    %78 = arith.index_cast %c2_i32 : i32 to index
    %c0_28 = arith.constant 0 : index
    %79 = vector.load %arg9[%78, %c0_28] : memref<8x384xf32, #tpu.memory_space<vmem>>, vector<1x384xf32>
    %80 = vector.extract_strided_slice %79 {offsets = [0, 0], sizes = [1, 128], strides = [1, 1]} : vector<1x384xf32> to vector<1x128xf32>
    %81 = vector.extract_strided_slice %77 {offsets = [0, 0], sizes = [1, 128], strides = [1, 1]} : vector<1x384xf32> to vector<1x128xf32>
    %82 = arith.addf %80, %81 : vector<1x128xf32>
    %83 = arith.negf %82 : vector<1x128xf32>
    %84 = math.exp %83 : vector<1x128xf32>
    %cst_29 = arith.constant 1.000000e+00 : f32
    %85 = vector.broadcast %cst_29 : f32 to vector<1x128xf32>
    %86 = arith.addf %85, %84 : vector<1x128xf32>
    %87 = arith.divf %85, %86 : vector<1x128xf32>
    %88 = vector.extract_strided_slice %79 {offsets = [0, 128], sizes = [1, 128], strides = [1, 1]} : vector<1x384xf32> to vector<1x128xf32>
    %89 = vector.extract_strided_slice %77 {offsets = [0, 128], sizes = [1, 128], strides = [1, 1]} : vector<1x384xf32> to vector<1x128xf32>
    %90 = arith.addf %88, %89 : vector<1x128xf32>
    %91 = arith.negf %90 : vector<1x128xf32>
    %92 = math.exp %91 : vector<1x128xf32>
    %cst_30 = arith.constant 1.000000e+00 : f32
    %93 = vector.broadcast %cst_30 : f32 to vector<1x128xf32>
    %94 = arith.addf %93, %92 : vector<1x128xf32>
    %95 = arith.divf %93, %94 : vector<1x128xf32>
    %96 = vector.extract_strided_slice %79 {offsets = [0, 256], sizes = [1, 128], strides = [1, 1]} : vector<1x384xf32> to vector<1x128xf32>
    %97 = vector.extract_strided_slice %77 {offsets = [0, 256], sizes = [1, 128], strides = [1, 1]} : vector<1x384xf32> to vector<1x128xf32>
    %98 = arith.addf %97, %11 : vector<1x128xf32>
    %99 = arith.mulf %87, %98 : vector<1x128xf32>
    %100 = arith.addf %96, %99 : vector<1x128xf32>
    %101 = math.tanh %100 : vector<1x128xf32>
    %cst_31 = arith.constant 1.000000e+00 : f32
    %102 = vector.broadcast %cst_31 : f32 to vector<1x128xf32>
    %103 = arith.subf %102, %95 : vector<1x128xf32>
    %104 = arith.mulf %103, %101 : vector<1x128xf32>
    %105 = arith.mulf %95, %74 : vector<1x128xf32>
    %106 = arith.addf %104, %105 : vector<1x128xf32>
    %107 = arith.index_cast %c2_i32 : i32 to index
    %c0_32 = arith.constant 0 : index
    %108 = vector.load %arg7[%107, %c0_32] : memref<8x128xf32, #tpu.memory_space<vmem>>, vector<1x128xf32>
    tpu.vector_store %arg7[%107, %c0_32], %106 {strides = array<i32>} : memref<8x128xf32, #tpu.memory_space<vmem>>, vector<1x128xf32>,
    %c3_i32 = arith.constant 3 : i32
    %cst_33 = arith.constant dense<0.000000e+00> : vector<1x384xf32>
    %109 = tpu.matmul %106, %10, %cst_33 {dimension_numbers = #tpu.dot_dimension_numbers<[1], [0], [0], [1], [0, 0, 1, 1], [], []>} : vector<1x128xf32>, vector<128x384xf32>, vector<1x384xf32> -> vector<1x384xf32>
    %110 = arith.index_cast %c3_i32 : i32 to index
    %c0_34 = arith.constant 0 : index
    %111 = vector.load %arg9[%110, %c0_34] : memref<8x384xf32, #tpu.memory_space<vmem>>, vector<1x384xf32>
    %112 = vector.extract_strided_slice %111 {offsets = [0, 0], sizes = [1, 128], strides = [1, 1]} : vector<1x384xf32> to vector<1x128xf32>
    %113 = vector.extract_strided_slice %109 {offsets = [0, 0], sizes = [1, 128], strides = [1, 1]} : vector<1x384xf32> to vector<1x128xf32>
    %114 = arith.addf %112, %113 : vector<1x128xf32>
    %115 = arith.negf %114 : vector<1x128xf32>
    %116 = math.exp %115 : vector<1x128xf32>
    %cst_35 = arith.constant 1.000000e+00 : f32
    %117 = vector.broadcast %cst_35 : f32 to vector<1x128xf32>
    %118 = arith.addf %117, %116 : vector<1x128xf32>
    %119 = arith.divf %117, %118 : vector<1x128xf32>
    %120 = vector.extract_strided_slice %111 {offsets = [0, 128], sizes = [1, 128], strides = [1, 1]} : vector<1x384xf32> to vector<1x128xf32>
    %121 = vector.extract_strided_slice %109 {offsets = [0, 128], sizes = [1, 128], strides = [1, 1]} : vector<1x384xf32> to vector<1x128xf32>
    %122 = arith.addf %120, %121 : vector<1x128xf32>
    %123 = arith.negf %122 : vector<1x128xf32>
    %124 = math.exp %123 : vector<1x128xf32>
    %cst_36 = arith.constant 1.000000e+00 : f32
    %125 = vector.broadcast %cst_36 : f32 to vector<1x128xf32>
    %126 = arith.addf %125, %124 : vector<1x128xf32>
    %127 = arith.divf %125, %126 : vector<1x128xf32>
    %128 = vector.extract_strided_slice %111 {offsets = [0, 256], sizes = [1, 128], strides = [1, 1]} : vector<1x384xf32> to vector<1x128xf32>
    %129 = vector.extract_strided_slice %109 {offsets = [0, 256], sizes = [1, 128], strides = [1, 1]} : vector<1x384xf32> to vector<1x128xf32>
    %130 = arith.addf %129, %11 : vector<1x128xf32>
    %131 = arith.mulf %119, %130 : vector<1x128xf32>
    %132 = arith.addf %128, %131 : vector<1x128xf32>
    %133 = math.tanh %132 : vector<1x128xf32>
    %cst_37 = arith.constant 1.000000e+00 : f32
    %134 = vector.broadcast %cst_37 : f32 to vector<1x128xf32>
    %135 = arith.subf %134, %127 : vector<1x128xf32>
    %136 = arith.mulf %135, %133 : vector<1x128xf32>
    %137 = arith.mulf %127, %106 : vector<1x128xf32>
    %138 = arith.addf %136, %137 : vector<1x128xf32>
    %139 = arith.index_cast %c3_i32 : i32 to index
    %c0_38 = arith.constant 0 : index
    %140 = vector.load %arg7[%139, %c0_38] : memref<8x128xf32, #tpu.memory_space<vmem>>, vector<1x128xf32>
    tpu.vector_store %arg7[%139, %c0_38], %138 {strides = array<i32>} : memref<8x128xf32, #tpu.memory_space<vmem>>, vector<1x128xf32>,
    %c4_i32 = arith.constant 4 : i32
    %cst_39 = arith.constant dense<0.000000e+00> : vector<1x384xf32>
    %141 = tpu.matmul %138, %10, %cst_39 {dimension_numbers = #tpu.dot_dimension_numbers<[1], [0], [0], [1], [0, 0, 1, 1], [], []>} : vector<1x128xf32>, vector<128x384xf32>, vector<1x384xf32> -> vector<1x384xf32>
    %142 = arith.index_cast %c4_i32 : i32 to index
    %c0_40 = arith.constant 0 : index
    %143 = vector.load %arg9[%142, %c0_40] : memref<8x384xf32, #tpu.memory_space<vmem>>, vector<1x384xf32>
    %144 = vector.extract_strided_slice %143 {offsets = [0, 0], sizes = [1, 128], strides = [1, 1]} : vector<1x384xf32> to vector<1x128xf32>
    %145 = vector.extract_strided_slice %141 {offsets = [0, 0], sizes = [1, 128], strides = [1, 1]} : vector<1x384xf32> to vector<1x128xf32>
    %146 = arith.addf %144, %145 : vector<1x128xf32>
    %147 = arith.negf %146 : vector<1x128xf32>
    %148 = math.exp %147 : vector<1x128xf32>
    %cst_41 = arith.constant 1.000000e+00 : f32
    %149 = vector.broadcast %cst_41 : f32 to vector<1x128xf32>
    %150 = arith.addf %149, %148 : vector<1x128xf32>
    %151 = arith.divf %149, %150 : vector<1x128xf32>
    %152 = vector.extract_strided_slice %143 {offsets = [0, 128], sizes = [1, 128], strides = [1, 1]} : vector<1x384xf32> to vector<1x128xf32>
    %153 = vector.extract_strided_slice %141 {offsets = [0, 128], sizes = [1, 128], strides = [1, 1]} : vector<1x384xf32> to vector<1x128xf32>
    %154 = arith.addf %152, %153 : vector<1x128xf32>
    %155 = arith.negf %154 : vector<1x128xf32>
    %156 = math.exp %155 : vector<1x128xf32>
    %cst_42 = arith.constant 1.000000e+00 : f32
    %157 = vector.broadcast %cst_42 : f32 to vector<1x128xf32>
    %158 = arith.addf %157, %156 : vector<1x128xf32>
    %159 = arith.divf %157, %158 : vector<1x128xf32>
    %160 = vector.extract_strided_slice %143 {offsets = [0, 256], sizes = [1, 128], strides = [1, 1]} : vector<1x384xf32> to vector<1x128xf32>
    %161 = vector.extract_strided_slice %141 {offsets = [0, 256], sizes = [1, 128], strides = [1, 1]} : vector<1x384xf32> to vector<1x128xf32>
    %162 = arith.addf %161, %11 : vector<1x128xf32>
    %163 = arith.mulf %151, %162 : vector<1x128xf32>
    %164 = arith.addf %160, %163 : vector<1x128xf32>
    %165 = math.tanh %164 : vector<1x128xf32>
    %cst_43 = arith.constant 1.000000e+00 : f32
    %166 = vector.broadcast %cst_43 : f32 to vector<1x128xf32>
    %167 = arith.subf %166, %159 : vector<1x128xf32>
    %168 = arith.mulf %167, %165 : vector<1x128xf32>
    %169 = arith.mulf %159, %138 : vector<1x128xf32>
    %170 = arith.addf %168, %169 : vector<1x128xf32>
    %171 = arith.index_cast %c4_i32 : i32 to index
    %c0_44 = arith.constant 0 : index
    %172 = vector.load %arg7[%171, %c0_44] : memref<8x128xf32, #tpu.memory_space<vmem>>, vector<1x128xf32>
    tpu.vector_store %arg7[%171, %c0_44], %170 {strides = array<i32>} : memref<8x128xf32, #tpu.memory_space<vmem>>, vector<1x128xf32>,
    %c5_i32 = arith.constant 5 : i32
    %cst_45 = arith.constant dense<0.000000e+00> : vector<1x384xf32>
    %173 = tpu.matmul %170, %10, %cst_45 {dimension_numbers = #tpu.dot_dimension_numbers<[1], [0], [0], [1], [0, 0, 1, 1], [], []>} : vector<1x128xf32>, vector<128x384xf32>, vector<1x384xf32> -> vector<1x384xf32>
    %174 = arith.index_cast %c5_i32 : i32 to index
    %c0_46 = arith.constant 0 : index
    %175 = vector.load %arg9[%174, %c0_46] : memref<8x384xf32, #tpu.memory_space<vmem>>, vector<1x384xf32>
    %176 = vector.extract_strided_slice %175 {offsets = [0, 0], sizes = [1, 128], strides = [1, 1]} : vector<1x384xf32> to vector<1x128xf32>
    %177 = vector.extract_strided_slice %173 {offsets = [0, 0], sizes = [1, 128], strides = [1, 1]} : vector<1x384xf32> to vector<1x128xf32>
    %178 = arith.addf %176, %177 : vector<1x128xf32>
    %179 = arith.negf %178 : vector<1x128xf32>
    %180 = math.exp %179 : vector<1x128xf32>
    %cst_47 = arith.constant 1.000000e+00 : f32
    %181 = vector.broadcast %cst_47 : f32 to vector<1x128xf32>
    %182 = arith.addf %181, %180 : vector<1x128xf32>
    %183 = arith.divf %181, %182 : vector<1x128xf32>
    %184 = vector.extract_strided_slice %175 {offsets = [0, 128], sizes = [1, 128], strides = [1, 1]} : vector<1x384xf32> to vector<1x128xf32>
    %185 = vector.extract_strided_slice %173 {offsets = [0, 128], sizes = [1, 128], strides = [1, 1]} : vector<1x384xf32> to vector<1x128xf32>
    %186 = arith.addf %184, %185 : vector<1x128xf32>
    %187 = arith.negf %186 : vector<1x128xf32>
    %188 = math.exp %187 : vector<1x128xf32>
    %cst_48 = arith.constant 1.000000e+00 : f32
    %189 = vector.broadcast %cst_48 : f32 to vector<1x128xf32>
    %190 = arith.addf %189, %188 : vector<1x128xf32>
    %191 = arith.divf %189, %190 : vector<1x128xf32>
    %192 = vector.extract_strided_slice %175 {offsets = [0, 256], sizes = [1, 128], strides = [1, 1]} : vector<1x384xf32> to vector<1x128xf32>
    %193 = vector.extract_strided_slice %173 {offsets = [0, 256], sizes = [1, 128], strides = [1, 1]} : vector<1x384xf32> to vector<1x128xf32>
    %194 = arith.addf %193, %11 : vector<1x128xf32>
    %195 = arith.mulf %183, %194 : vector<1x128xf32>
    %196 = arith.addf %192, %195 : vector<1x128xf32>
    %197 = math.tanh %196 : vector<1x128xf32>
    %cst_49 = arith.constant 1.000000e+00 : f32
    %198 = vector.broadcast %cst_49 : f32 to vector<1x128xf32>
    %199 = arith.subf %198, %191 : vector<1x128xf32>
    %200 = arith.mulf %199, %197 : vector<1x128xf32>
    %201 = arith.mulf %191, %170 : vector<1x128xf32>
    %202 = arith.addf %200, %201 : vector<1x128xf32>
    %203 = arith.index_cast %c5_i32 : i32 to index
    %c0_50 = arith.constant 0 : index
    %204 = vector.load %arg7[%203, %c0_50] : memref<8x128xf32, #tpu.memory_space<vmem>>, vector<1x128xf32>
    tpu.vector_store %arg7[%203, %c0_50], %202 {strides = array<i32>} : memref<8x128xf32, #tpu.memory_space<vmem>>, vector<1x128xf32>,
    %c6_i32 = arith.constant 6 : i32
    %cst_51 = arith.constant dense<0.000000e+00> : vector<1x384xf32>
    %205 = tpu.matmul %202, %10, %cst_51 {dimension_numbers = #tpu.dot_dimension_numbers<[1], [0], [0], [1], [0, 0, 1, 1], [], []>} : vector<1x128xf32>, vector<128x384xf32>, vector<1x384xf32> -> vector<1x384xf32>
    %206 = arith.index_cast %c6_i32 : i32 to index
    %c0_52 = arith.constant 0 : index
    %207 = vector.load %arg9[%206, %c0_52] : memref<8x384xf32, #tpu.memory_space<vmem>>, vector<1x384xf32>
    %208 = vector.extract_strided_slice %207 {offsets = [0, 0], sizes = [1, 128], strides = [1, 1]} : vector<1x384xf32> to vector<1x128xf32>
    %209 = vector.extract_strided_slice %205 {offsets = [0, 0], sizes = [1, 128], strides = [1, 1]} : vector<1x384xf32> to vector<1x128xf32>
    %210 = arith.addf %208, %209 : vector<1x128xf32>
    %211 = arith.negf %210 : vector<1x128xf32>
    %212 = math.exp %211 : vector<1x128xf32>
    %cst_53 = arith.constant 1.000000e+00 : f32
    %213 = vector.broadcast %cst_53 : f32 to vector<1x128xf32>
    %214 = arith.addf %213, %212 : vector<1x128xf32>
    %215 = arith.divf %213, %214 : vector<1x128xf32>
    %216 = vector.extract_strided_slice %207 {offsets = [0, 128], sizes = [1, 128], strides = [1, 1]} : vector<1x384xf32> to vector<1x128xf32>
    %217 = vector.extract_strided_slice %205 {offsets = [0, 128], sizes = [1, 128], strides = [1, 1]} : vector<1x384xf32> to vector<1x128xf32>
    %218 = arith.addf %216, %217 : vector<1x128xf32>
    %219 = arith.negf %218 : vector<1x128xf32>
    %220 = math.exp %219 : vector<1x128xf32>
    %cst_54 = arith.constant 1.000000e+00 : f32
    %221 = vector.broadcast %cst_54 : f32 to vector<1x128xf32>
    %222 = arith.addf %221, %220 : vector<1x128xf32>
    %223 = arith.divf %221, %222 : vector<1x128xf32>
    %224 = vector.extract_strided_slice %207 {offsets = [0, 256], sizes = [1, 128], strides = [1, 1]} : vector<1x384xf32> to vector<1x128xf32>
    %225 = vector.extract_strided_slice %205 {offsets = [0, 256], sizes = [1, 128], strides = [1, 1]} : vector<1x384xf32> to vector<1x128xf32>
    %226 = arith.addf %225, %11 : vector<1x128xf32>
    %227 = arith.mulf %215, %226 : vector<1x128xf32>
    %228 = arith.addf %224, %227 : vector<1x128xf32>
    %229 = math.tanh %228 : vector<1x128xf32>
    %cst_55 = arith.constant 1.000000e+00 : f32
    %230 = vector.broadcast %cst_55 : f32 to vector<1x128xf32>
    %231 = arith.subf %230, %223 : vector<1x128xf32>
    %232 = arith.mulf %231, %229 : vector<1x128xf32>
    %233 = arith.mulf %223, %202 : vector<1x128xf32>
    %234 = arith.addf %232, %233 : vector<1x128xf32>
    %235 = arith.index_cast %c6_i32 : i32 to index
    %c0_56 = arith.constant 0 : index
    %236 = vector.load %arg7[%235, %c0_56] : memref<8x128xf32, #tpu.memory_space<vmem>>, vector<1x128xf32>
    tpu.vector_store %arg7[%235, %c0_56], %234 {strides = array<i32>} : memref<8x128xf32, #tpu.memory_space<vmem>>, vector<1x128xf32>,
    %c7_i32 = arith.constant 7 : i32
    %cst_57 = arith.constant dense<0.000000e+00> : vector<1x384xf32>
    %237 = tpu.matmul %234, %10, %cst_57 {dimension_numbers = #tpu.dot_dimension_numbers<[1], [0], [0], [1], [0, 0, 1, 1], [], []>} : vector<1x128xf32>, vector<128x384xf32>, vector<1x384xf32> -> vector<1x384xf32>
    %238 = arith.index_cast %c7_i32 : i32 to index
    %c0_58 = arith.constant 0 : index
    %239 = vector.load %arg9[%238, %c0_58] : memref<8x384xf32, #tpu.memory_space<vmem>>, vector<1x384xf32>
    %240 = vector.extract_strided_slice %239 {offsets = [0, 0], sizes = [1, 128], strides = [1, 1]} : vector<1x384xf32> to vector<1x128xf32>
    %241 = vector.extract_strided_slice %237 {offsets = [0, 0], sizes = [1, 128], strides = [1, 1]} : vector<1x384xf32> to vector<1x128xf32>
    %242 = arith.addf %240, %241 : vector<1x128xf32>
    %243 = arith.negf %242 : vector<1x128xf32>
    %244 = math.exp %243 : vector<1x128xf32>
    %cst_59 = arith.constant 1.000000e+00 : f32
    %245 = vector.broadcast %cst_59 : f32 to vector<1x128xf32>
    %246 = arith.addf %245, %244 : vector<1x128xf32>
    %247 = arith.divf %245, %246 : vector<1x128xf32>
    %248 = vector.extract_strided_slice %239 {offsets = [0, 128], sizes = [1, 128], strides = [1, 1]} : vector<1x384xf32> to vector<1x128xf32>
    %249 = vector.extract_strided_slice %237 {offsets = [0, 128], sizes = [1, 128], strides = [1, 1]} : vector<1x384xf32> to vector<1x128xf32>
    %250 = arith.addf %248, %249 : vector<1x128xf32>
    %251 = arith.negf %250 : vector<1x128xf32>
    %252 = math.exp %251 : vector<1x128xf32>
    %cst_60 = arith.constant 1.000000e+00 : f32
    %253 = vector.broadcast %cst_60 : f32 to vector<1x128xf32>
    %254 = arith.addf %253, %252 : vector<1x128xf32>
    %255 = arith.divf %253, %254 : vector<1x128xf32>
    %256 = vector.extract_strided_slice %239 {offsets = [0, 256], sizes = [1, 128], strides = [1, 1]} : vector<1x384xf32> to vector<1x128xf32>
    %257 = vector.extract_strided_slice %237 {offsets = [0, 256], sizes = [1, 128], strides = [1, 1]} : vector<1x384xf32> to vector<1x128xf32>
    %258 = arith.addf %257, %11 : vector<1x128xf32>
    %259 = arith.mulf %247, %258 : vector<1x128xf32>
    %260 = arith.addf %256, %259 : vector<1x128xf32>
    %261 = math.tanh %260 : vector<1x128xf32>
    %cst_61 = arith.constant 1.000000e+00 : f32
    %262 = vector.broadcast %cst_61 : f32 to vector<1x128xf32>
    %263 = arith.subf %262, %255 : vector<1x128xf32>
    %264 = arith.mulf %263, %261 : vector<1x128xf32>
    %265 = arith.mulf %255, %234 : vector<1x128xf32>
    %266 = arith.addf %264, %265 : vector<1x128xf32>
    %267 = arith.index_cast %c7_i32 : i32 to index
    %c0_62 = arith.constant 0 : index
    %268 = vector.load %arg7[%267, %c0_62] : memref<8x128xf32, #tpu.memory_space<vmem>>, vector<1x128xf32>
    tpu.vector_store %arg7[%267, %c0_62], %266 {strides = array<i32>} : memref<8x128xf32, #tpu.memory_space<vmem>>, vector<1x128xf32>,
    %c8_i32 = arith.constant 8 : i32
    %c0_63 = arith.constant 0 : index
    %c0_64 = arith.constant 0 : index
    %269 = vector.load %arg8[%c0_63, %c0_64] : memref<1x128xf32, #tpu.memory_space<vmem>>, vector<1x128xf32>
    tpu.vector_store %arg8[%c0_63, %c0_64], %266 {strides = array<i32>} : memref<1x128xf32, #tpu.memory_space<vmem>>, vector<1x128xf32>,
    return
  }
  func.func @transform_0(%arg0: i32) -> (i32, i32) {
    %c0_i32 = arith.constant 0 : i32
    %c0_i32_0 = arith.constant 0 : i32
    return %arg0, %c0_i32 : i32, i32
  }
  func.func @transform_1(%arg0: i32) -> (i32, i32) {
    %c0_i32 = arith.constant 0 : i32
    %c0_i32_0 = arith.constant 0 : i32
    %c0_i32_1 = arith.constant 0 : i32
    return %c0_i32, %c0_i32_0 : i32, i32
  }
  func.func @transform_2(%arg0: i32) -> (i32, i32) {
    %c0_i32 = arith.constant 0 : i32
    %c0_i32_0 = arith.constant 0 : i32
    %c0_i32_1 = arith.constant 0 : i32
    return %c0_i32, %c0_i32_0 : i32, i32
  }
  func.func @transform_3(%arg0: i32) -> (i32, i32) {
    %c0_i32 = arith.constant 0 : i32
    %c0_i32_0 = arith.constant 0 : i32
    %c0_i32_1 = arith.constant 0 : i32
    return %c0_i32, %c0_i32_0 : i32, i32
  }
  func.func @transform_4(%arg0: i32) -> (i32, i32) {
    %c0_i32 = arith.constant 0 : i32
    %c0_i32_0 = arith.constant 0 : i32
    %c0_i32_1 = arith.constant 0 : i32
    return %c0_i32, %c0_i32_0 : i32, i32
  }
  func.func @transform_5(%arg0: i32) -> (i32, i32) {
    %c0_i32 = arith.constant 0 : i32
    %c0_i32_0 = arith.constant 0 : i32
    %c0_i32_1 = arith.constant 0 : i32
    return %c0_i32, %c0_i32_0 : i32, i32
  }
  func.func @transform_6(%arg0: i32) -> (i32, i32) {
    %c0_i32 = arith.constant 0 : i32
    %c0_i32_0 = arith.constant 0 : i32
    return %arg0, %c0_i32 : i32, i32
  }
}

</mosaic_0001>

<llo_original>
// kernel: encoder_rnn_forward.1
$region0: #{encoder_rnn_forward.1}
  #allocation0 [shape = 'u32[]', space=smem, size = 0x4, offset = 0x4, fixed_abs, tag = 'smem constant byte address 0x4 - core index']
  #allocation1 [shape = 'u32[144,128]{1,0:T(1,128)}', space=vmem, size = 0x12000, scoped, tag = 'internal scratch']
  #allocation2 [shape = 'f32[1,128]{1,0:T(1,128)}', space=vmem, size = 0x200, scoped, tag = 'scratch operand']
  #allocation3 [shape = 'f32[8,384]{1,0:T(8,128)}', space=vmem, size = 0x3000, scoped, tag = 'scratch operand']
  %s0 = inlined_call_operand.vmem [shape: f32[8,32], index: 0, kind: input, shape index: {}]
  %s1 = inlined_call_operand.vmem [shape: f32[32,384], index: 1, kind: input, shape index: {}]
  %s2 = inlined_call_operand.vmem [shape: f32[128,384], index: 2, kind: input, shape index: {}]
  %s3 = inlined_call_operand.vmem [shape: f32[1,384], index: 3, kind: input, shape index: {}]
  %s4 = inlined_call_operand.vmem [shape: f32[1,128], index: 4, kind: input, shape index: {}]
  %s5 = inlined_call_operand.vmem [shape: f32[1,128], index: 5, kind: input, shape index: {}]
  %s6 = inlined_call_operand.vmem [shape: f32[8,128], index: 6, kind: output, shape index: {}]
  %s7 = sld [smem:[#allocation0]]
  $region38: #{encoder_rnn_forward.1} parent=0
    _
  %s9 = ssub.s32 1, %s7
  %s10 = scalar_select 0, %s9, %s7
  // Predicated region
  $region2: #{encoder_rnn_forward.1} parent=0 // pred_check
    _
  $region3: #{encoder_rnn_forward.1} parent=0 // pred_check_branch
    %12 = sbr.rel (0) target = $region5
  $region4: #{encoder_rnn_forward.1} parent=0 // pred_region
    _
  $region5: #{encoder_rnn_forward.1} parent=0 // pred_fallthru
    _
  // Predicated region
  $region6: #{encoder_rnn_forward.1} parent=0 // pred_check
    _
  $region7: #{encoder_rnn_forward.1} parent=0 // pred_check_branch
    %14 = sbr.rel (0) target = $region9
  $region8: #{encoder_rnn_forward.1} parent=0 // pred_region
    _
  $region9: #{encoder_rnn_forward.1} parent=0 // pred_fallthru
    _
  // Predicated region
  $region10: #{encoder_rnn_forward.1} parent=0 // pred_check
    _
  $region11: #{encoder_rnn_forward.1} parent=0 // pred_check_branch
    %16 = sbr.rel (0) target = $region13
  $region12: #{encoder_rnn_forward.1} parent=0 // pred_region
    _
  $region13: #{encoder_rnn_forward.1} parent=0 // pred_fallthru
    _
  // Predicated region
  $region14: #{encoder_rnn_forward.1} parent=0 // pred_check
    _
  $region15: #{encoder_rnn_forward.1} parent=0 // pred_check_branch
    %18 = sbr.rel (0) target = $region17
  $region16: #{encoder_rnn_forward.1} parent=0 // pred_region
    _
  $region17: #{encoder_rnn_forward.1} parent=0 // pred_fallthru
    _
  // Predicated region
  $region18: #{encoder_rnn_forward.1} parent=0 // pred_check
    _
  $region19: #{encoder_rnn_forward.1} parent=0 // pred_check_branch
    %20 = sbr.rel (0) target = $region21
  $region20: #{encoder_rnn_forward.1} parent=0 // pred_region
    _
  $region21: #{encoder_rnn_forward.1} parent=0 // pred_fallthru
    _
  // Predicated region
  $region22: #{encoder_rnn_forward.1} parent=0 // pred_check
    _
  $region23: #{encoder_rnn_forward.1} parent=0 // pred_check_branch
    %22 = sbr.rel (0) target = $region25
  $region24: #{encoder_rnn_forward.1} parent=0 // pred_region
    _
  $region25: #{encoder_rnn_forward.1} parent=0 // pred_fallthru
    _
  %p23 = scmp.eq.s32.totalorder 0, 0
  // Predicated region
  $region26: #{encoder_rnn_forward.1} parent=0 // pred_check
    %p24 = pneg %p23
  $region27: #{encoder_rnn_forward.1} parent=0 // pred_check_branch
    %26 = sbr.rel (%p24) target = $region29
  $region28: #{encoder_rnn_forward.1} parent=0 // pred_region
    %v27 = vld [vmem:[%s5] sm:$0x1]
    %28 = vst [vmem:[#allocation2] sm:$0x1] %v27
  $region29: #{encoder_rnn_forward.1} parent=0 // pred_fallthru
    _
  %v29 = vld [vmem:[%s0] sm:$0xff]
  %v30 = vld [vmem:[%s1] sm:$0xff]
  %v31 = vld [vmem:[%s1 + $0x8] sm:$0xff]
  %v32 = vld [vmem:[%s1 + $0x10] sm:$0xff]
  %v33 = vld [vmem:[%s1 + $0x18] sm:$0xff]
  %v34 = vld [vmem:[%s1 + $0x20] sm:$0xff]
  %v35 = vld [vmem:[%s1 + $0x28] sm:$0xff]
  %v36 = vld [vmem:[%s1 + $0x30] sm:$0xff]
  %v37 = vld [vmem:[%s1 + $0x38] sm:$0xff]
  %v38 = vld [vmem:[%s1 + $0x40] sm:$0xff]
  %v39 = vld [vmem:[%s1 + $0x48] sm:$0xff]
  %v40 = vld [vmem:[%s1 + $0x50] sm:$0xff]
  %v41 = vld [vmem:[%s1 + $0x58] sm:$0xff]
  %v42 = vld [vmem:[%s3] sm:$0x7]
  %v44 = vlaneseq
  %v45 = vshrl.u32 %v44, 7
  %v46 = vsub.s32 0, %v45
  %v47 = vrot.slane %v42, %v46
  %v48 = vlaneseq
  %v49 = vshrl.u32 %v48, 7
  %v50 = vsub.s32 1, %v49
  %v51 = vrot.slane %v42, %v50
  %v52 = vlaneseq
  %v53 = vshrl.u32 %v52, 7
  %v54 = vsub.s32 2, %v53
  %v55 = vrot.slane %v42, %v54
  %vm59 = vcmask 261120
  %v61 = vsel %vm59, %v29, 0
  %63 = vmatprep.subr.mxu0 %v31
  %64 = vmatpush1.msra.mxu0 %v30
  %65 = vmatprep.subr.mxu0 %v34
  %66 = vmatpush1.msra.mxu0 %v33
  %67 = vmatprep.subr.mxu0 %v37
  %68 = vmatpush1.msra.mxu0 %v36
  %69 = vmatprep.subr.mxu0 %v40
  %70 = vmatpush1.msra.mxu0 %v39
  %71 = vmatprep.subr.mxu0 0.0
  %72 = vmatpush1.msra.mxu0 0.0
  %73 = vmatprep.subr.mxu0 0.0
  %74 = vmatpush1.msra.mxu0 0.0
  %75 = vmatprep.subr.mxu0 0.0
  %76 = vmatpush1.msra.mxu0 0.0
  %77 = vmatprep.subr.mxu0 0.0
  %78 = vmatpush1.msra.mxu0 0.0
  %79 = vmatprep.subr.mxu0 0.0
  %80 = vmatpush1.msra.mxu0 0.0
  %81 = vmatprep.subr.mxu0 0.0
  %82 = vmatpush1.msra.mxu0 0.0
  %83 = vmatprep.subr.mxu0 0.0
  %84 = vmatpush1.msra.mxu0 0.0
  %85 = vmatprep.subr.mxu0 0.0
  %86 = vmatpush1.msra.mxu0 0.0
  %87 = vmatprep.subr.mxu0 0.0
  %88 = vmatpush1.msra.mxu0 0.0
  %89 = vmatprep.subr.mxu0 0.0
  %90 = vmatpush1.msra.mxu0 0.0
  %91 = vmatprep.subr.mxu0 0.0
  %92 = vmatpush1.msra.mxu0 0.0
  %93 = vmatprep.subr.mxu0 0.0
  %94 = vmatpush1.msra.mxu0 0.0
  %95 = vmatprep.subr.mxu0 0.0
  %96 = vmatpush1.msra.mxu0 0.0
  %97 = vmatprep.subr.mxu0 0.0
  %98 = vmatpush1.msra.mxu0 0.0
  %99 = vmatprep.subr.mxu0 0.0
  %100 = vmatpush1.msra.mxu0 0.0
  %101 = vmatprep.subr.mxu0 0.0
  %102 = vmatpush1.msra.mxu0 0.0
  %103 = vmatprep.subr.mxu0 0.0
  %104 = vmatpush1.msra.mxu0 0.0
  %105 = vmatprep.subr.mxu0 0.0
  %106 = vmatpush1.msra.mxu0 0.0
  %107 = vmatprep.subr.mxu0 0.0
  %108 = vmatpush1.msra.mxu0 0.0
  %109 = vmatprep.subr.mxu0 0.0
  %110 = vmatpush1.msra.mxu0 0.0
  %111 = vmatprep.subr.mxu0 0.0
  %112 = vmatpush1.msra.mxu0 0.0
  %113 = vmatprep.subr.mxu0 0.0
  %114 = vmatpush1.msra.mxu0 0.0
  %115 = vmatprep.subr.mxu0 0.0
  %116 = vmatpush1.msra.mxu0 0.0
  %117 = vmatprep.subr.mxu0 0.0
  %118 = vmatpush1.msra.mxu0 0.0
  %119 = vmatprep.subr.mxu0 0.0
  %120 = vmatpush1.msra.mxu0 0.0
  %121 = vmatprep.subr.mxu0 0.0
  %122 = vmatpush1.msra.mxu0 0.0
  %123 = vmatprep.subr.mxu0 0.0
  %124 = vmatpush1.msra.mxu0 0.0
  %125 = vmatprep.subr.mxu0 0.0
  %126 = vmatpush1.msra.mxu0 0.0
  %127 = vmatprep.mubr.f32.mxu0 0.0
  %128 = vmatmul.mubr.f32.gmra.mrb[0].mxu0 %v61
  %v129 = vpop.f32.mrb[0].mxu0
  %v130 = vadd.f32 %v47, %v129
  %v131 = vpop.f32.mrb[0].mxu0
  %v132 = vadd.f32 %v51, %v131
  %133 = vdwg.mxu0
  %134 = vmatprep.subr.mxu0 0.0
  %135 = vmatpush1.msra.mxu0 %v32
  %136 = vmatprep.subr.mxu0 0.0
  %137 = vmatpush1.msra.mxu0 %v35
  %138 = vmatprep.subr.mxu0 0.0
  %139 = vmatpush1.msra.mxu0 %v38
  %140 = vmatprep.subr.mxu0 0.0
  %141 = vmatpush1.msra.mxu0 %v41
  %142 = vmatprep.subr.mxu0 0.0
  %143 = vmatpush1.msra.mxu0 0.0
  %144 = vmatprep.subr.mxu0 0.0
  %145 = vmatpush1.msra.mxu0 0.0
  %146 = vmatprep.subr.mxu0 0.0
  %147 = vmatpush1.msra.mxu0 0.0
  %148 = vmatprep.subr.mxu0 0.0
  %149 = vmatpush1.msra.mxu0 0.0
  %150 = vmatprep.subr.mxu0 0.0
  %151 = vmatpush1.msra.mxu0 0.0
  %152 = vmatprep.subr.mxu0 0.0
  %153 = vmatpush1.msra.mxu0 0.0
  %154 = vmatprep.subr.mxu0 0.0
  %155 = vmatpush1.msra.mxu0 0.0
  %156 = vmatprep.subr.mxu0 0.0
  %157 = vmatpush1.msra.mxu0 0.0
  %158 = vmatprep.subr.mxu0 0.0
  %159 = vmatpush1.msra.mxu0 0.0
  %160 = vmatprep.subr.mxu0 0.0
  %161 = vmatpush1.msra.mxu0 0.0
  %162 = vmatprep.subr.mxu0 0.0
  %163 = vmatpush1.msra.mxu0 0.0
  %164 = vmatprep.subr.mxu0 0.0
  %165 = vmatpush1.msra.mxu0 0.0
  %166 = vmatprep.subr.mxu0 0.0
  %167 = vmatpush1.msra.mxu0 0.0
  %168 = vmatprep.subr.mxu0 0.0
  %169 = vmatpush1.msra.mxu0 0.0
  %170 = vmatprep.subr.mxu0 0.0
  %171 = vmatpush1.msra.mxu0 0.0
  %172 = vmatprep.subr.mxu0 0.0
  %173 = vmatpush1.msra.mxu0 0.0
  %174 = vmatprep.subr.mxu0 0.0
  %175 = vmatpush1.msra.mxu0 0.0
  %176 = vmatprep.subr.mxu0 0.0
  %177 = vmatpush1.msra.mxu0 0.0
  %178 = vmatprep.subr.mxu0 0.0
  %179 = vmatpush1.msra.mxu0 0.0
  %180 = vmatprep.subr.mxu0 0.0
  %181 = vmatpush1.msra.mxu0 0.0
  %182 = vmatprep.subr.mxu0 0.0
  %183 = vmatpush1.msra.mxu0 0.0
  %184 = vmatprep.subr.mxu0 0.0
  %185 = vmatpush1.msra.mxu0 0.0
  %186 = vmatprep.subr.mxu0 0.0
  %187 = vmatpush1.msra.mxu0 0.0
  %188 = vmatprep.subr.mxu0 0.0
  %189 = vmatpush1.msra.mxu0 0.0
  %190 = vmatprep.subr.mxu0 0.0
  %191 = vmatpush1.msra.mxu0 0.0
  %192 = vmatprep.subr.mxu0 0.0
  %193 = vmatpush1.msra.mxu0 0.0
  %194 = vmatprep.subr.mxu0 0.0
  %195 = vmatpush1.msra.mxu0 0.0
  %196 = vmatprep.subr.mxu0 0.0
  %197 = vmatpush1.msra.mxu0 0.0
  %198 = vmatprep.mubr.f32.mxu0 0.0
  %199 = vmatmul.mubr.f32.gmra.mrb[0].mxu0 %v61
  %v200 = vpop.f32.mrb[0].mxu0
  %v201 = vadd.f32 %v55, %v200
  %v202 = vpop.f32.mrb[0].mxu0
  %203 = vdwg.mxu0
  %204 = vst [vmem:[#allocation3] sm:$0xff] %v130
  %205 = vst [vmem:[#allocation3 + $0x8] sm:$0xff] %v132
  %206 = vst [vmem:[#allocation3 + $0x10] sm:$0xff] %v201
  %v207 = vld [vmem:[%s2] sm:$0xff]
  %v208 = vld [vmem:[%s2 + $0x8] sm:$0xff]
  %v209 = vld [vmem:[%s2 + $0x10] sm:$0xff]
  %v210 = vld [vmem:[%s2 + $0x18] sm:$0xff]
  %v211 = vld [vmem:[%s2 + $0x20] sm:$0xff]
  %v212 = vld [vmem:[%s2 + $0x28] sm:$0xff]
  %v213 = vld [vmem:[%s2 + $0x30] sm:$0xff]
  %v214 = vld [vmem:[%s2 + $0x38] sm:$0xff]
  %v215 = vld [vmem:[%s2 + $0x40] sm:$0xff]
  %v216 = vld [vmem:[%s2 + $0x48] sm:$0xff]
  %v217 = vld [vmem:[%s2 + $0x50] sm:$0xff]
  %v218 = vld [vmem:[%s2 + $0x58] sm:$0xff]
  %v219 = vld [vmem:[%s2 + $0x60] sm:$0xff]
  %v220 = vld [vmem:[%s2 + $0x68] sm:$0xff]
  %v221 = vld [vmem:[%s2 + $0x70] sm:$0xff]
  %v222 = vld [vmem:[%s2 + $0x78] sm:$0xff]
  %v223 = vld [vmem:[%s2 + $0x80] sm:$0xff]
  %v224 = vld [vmem:[%s2 + $0x88] sm:$0xff]
  %v225 = vld [vmem:[%s2 + $0x90] sm:$0xff]
  %v226 = vld [vmem:[%s2 + $0x98] sm:$0xff]
  %v227 = vld [vmem:[%s2 + $0xa0] sm:$0xff]
  %v228 = vld [vmem:[%s2 + $0xa8] sm:$0xff]
  %v229 = vld [vmem:[%s2 + $0xb0] sm:$0xff]
  %v230 = vld [vmem:[%s2 + $0xb8] sm:$0xff]
  %v231 = vld [vmem:[%s2 + $0xc0] sm:$0xff]
  %v232 = vld [vmem:[%s2 + $0xc8] sm:$0xff]
  %v233 = vld [vmem:[%s2 + $0xd0] sm:$0xff]
  %v234 = vld [vmem:[%s2 + $0xd8] sm:$0xff]
  %v235 = vld [vmem:[%s2 + $0xe0] sm:$0xff]
  %v236 = vld [vmem:[%s2 + $0xe8] sm:$0xff]
  %v237 = vld [vmem:[%s2 + $0xf0] sm:$0xff]
  %v238 = vld [vmem:[%s2 + $0xf8] sm:$0xff]
  %v239 = vld [vmem:[%s2 + $0x100] sm:$0xff]
  %v240 = vld [vmem:[%s2 + $0x108] sm:$0xff]
  %v241 = vld [vmem:[%s2 + $0x110] sm:$0xff]
  %v242 = vld [vmem:[%s2 + $0x118] sm:$0xff]
  %v243 = vld [vmem:[%s2 + $0x120] sm:$0xff]
  %v244 = vld [vmem:[%s2 + $0x128] sm:$0xff]
  %v245 = vld [vmem:[%s2 + $0x130] sm:$0xff]
  %v246 = vld [vmem:[%s2 + $0x138] sm:$0xff]
  %v247 = vld [vmem:[%s2 + $0x140] sm:$0xff]
  %v248 = vld [vmem:[%s2 + $0x148] sm:$0xff]
  %v249 = vld [vmem:[%s2 + $0x150] sm:$0xff]
  %v250 = vld [vmem:[%s2 + $0x158] sm:$0xff]
  %v251 = vld [vmem:[%s2 + $0x160] sm:$0xff]
  %v252 = vld [vmem:[%s2 + $0x168] sm:$0xff]
  %v253 = vld [vmem:[%s2 + $0x170] sm:$0xff]
  %v254 = vld [vmem:[%s2 + $0x178] sm:$0xff]
  %v255 = vld [vmem:[%s4] sm:$0x1]
  %v256 = vld [vmem:[#allocation2] sm:$0x1]
  %257 = vmatprep.subr.mxu0 %v208
  %258 = vmatpush1.msra.mxu0 %v207
  %259 = vmatprep.subr.mxu0 %v211
  %260 = vmatpush1.msra.mxu0 %v210
  %261 = vmatprep.subr.mxu0 %v214
  %262 = vmatpush1.msra.mxu0 %v213
  %263 = vmatprep.subr.mxu0 %v217
  %264 = vmatpush1.msra.mxu0 %v216
  %265 = vmatprep.subr.mxu0 %v220
  %266 = vmatpush1.msra.mxu0 %v219
  %267 = vmatprep.subr.mxu0 %v223
  %268 = vmatpush1.msra.mxu0 %v222
  %269 = vmatprep.subr.mxu0 %v226
  %270 = vmatpush1.msra.mxu0 %v225
  %271 = vmatprep.subr.mxu0 %v229
  %272 = vmatpush1.msra.mxu0 %v228
  %273 = vmatprep.subr.mxu0 %v232
  %274 = vmatpush1.msra.mxu0 %v231
  %275 = vmatprep.subr.mxu0 %v235
  %276 = vmatpush1.msra.mxu0 %v234
  %277 = vmatprep.subr.mxu0 %v238
  %278 = vmatpush1.msra.mxu0 %v237
  %279 = vmatprep.subr.mxu0 %v241
  %280 = vmatpush1.msra.mxu0 %v240
  %281 = vmatprep.subr.mxu0 %v244
  %282 = vmatpush1.msra.mxu0 %v243
  %283 = vmatprep.subr.mxu0 %v247
  %284 = vmatpush1.msra.mxu0 %v246
  %285 = vmatprep.subr.mxu0 %v250
  %286 = vmatpush1.msra.mxu0 %v249
  %287 = vmatprep.subr.mxu0 %v253
  %288 = vmatpush1.msra.mxu0 %v252
  %289 = vmatprep.subr.mxu0 0.0
  %290 = vmatpush1.msra.mxu0 0.0
  %291 = vmatprep.subr.mxu0 0.0
  %292 = vmatpush1.msra.mxu0 0.0
  %293 = vmatprep.subr.mxu0 0.0
  %294 = vmatpush1.msra.mxu0 0.0
  %295 = vmatprep.subr.mxu0 0.0
  %296 = vmatpush1.msra.mxu0 0.0
  %297 = vmatprep.subr.mxu0 0.0
  %298 = vmatpush1.msra.mxu0 0.0
  %299 = vmatprep.subr.mxu0 0.0
  %300 = vmatpush1.msra.mxu0 0.0
  %301 = vmatprep.subr.mxu0 0.0
  %302 = vmatpush1.msra.mxu0 0.0
  %303 = vmatprep.subr.mxu0 0.0
  %304 = vmatpush1.msra.mxu0 0.0
  %305 = vmatprep.subr.mxu0 0.0
  %306 = vmatpush1.msra.mxu0 0.0
  %307 = vmatprep.subr.mxu0 0.0
  %308 = vmatpush1.msra.mxu0 0.0
  %309 = vmatprep.subr.mxu0 0.0
  %310 = vmatpush1.msra.mxu0 0.0
  %311 = vmatprep.subr.mxu0 0.0
  %312 = vmatpush1.msra.mxu0 0.0
  %313 = vmatprep.subr.mxu0 0.0
  %314 = vmatpush1.msra.mxu0 0.0
  %315 = vmatprep.subr.mxu0 0.0
  %316 = vmatpush1.msra.mxu0 0.0
  %317 = vmatprep.subr.mxu0 0.0
  %318 = vmatpush1.msra.mxu0 0.0
  %319 = vmatprep.subr.mxu0 0.0
  %320 = vmatpush1.msra.mxu0 0.0
  %321 = vmatprep.mubr.f32.mxu0 0.0
  %322 = vmatmul.mubr.f32.gmra.mrb[0].mxu0 %v256
  %v323 = vpop.f32.mrb[0].mxu0
  %v324 = vadd.f32 0.0, %v323
  %v325 = vpop.f32.mrb[0].mxu0
  %v326 = vadd.f32 0.0, %v325
  %327 = vdwg.mxu0
  %328 = vmatprep.subr.mxu0 0.0
  %329 = vmatpush1.msra.mxu0 %v209
  %330 = vmatprep.subr.mxu0 0.0
  %331 = vmatpush1.msra.mxu0 %v212
  %332 = vmatprep.subr.mxu0 0.0
  %333 = vmatpush1.msra.mxu0 %v215
  %334 = vmatprep.subr.mxu0 0.0
  %335 = vmatpush1.msra.mxu0 %v218
  %336 = vmatprep.subr.mxu0 0.0
  %337 = vmatpush1.msra.mxu0 %v221
  %338 = vmatprep.subr.mxu0 0.0
  %339 = vmatpush1.msra.mxu0 %v224
  %340 = vmatprep.subr.mxu0 0.0
  %341 = vmatpush1.msra.mxu0 %v227
  %342 = vmatprep.subr.mxu0 0.0
  %343 = vmatpush1.msra.mxu0 %v230
  %344 = vmatprep.subr.mxu0 0.0
  %345 = vmatpush1.msra.mxu0 %v233
  %346 = vmatprep.subr.mxu0 0.0
  %347 = vmatpush1.msra.mxu0 %v236
  %348 = vmatprep.subr.mxu0 0.0
  %349 = vmatpush1.msra.mxu0 %v239
  %350 = vmatprep.subr.mxu0 0.0
  %351 = vmatpush1.msra.mxu0 %v242
  %352 = vmatprep.subr.mxu0 0.0
  %353 = vmatpush1.msra.mxu0 %v245
  %354 = vmatprep.subr.mxu0 0.0
  %355 = vmatpush1.msra.mxu0 %v248
  %356 = vmatprep.subr.mxu0 0.0
  %357 = vmatpush1.msra.mxu0 %v251
  %358 = vmatprep.subr.mxu0 0.0
  %359 = vmatpush1.msra.mxu0 %v254
  %360 = vmatprep.subr.mxu0 0.0
  %361 = vmatpush1.msra.mxu0 0.0
  %362 = vmatprep.subr.mxu0 0.0
  %363 = vmatpush1.msra.mxu0 0.0
  %364 = vmatprep.subr.mxu0 0.0
  %365 = vmatpush1.msra.mxu0 0.0
  %366 = vmatprep.subr.mxu0 0.0
  %367 = vmatpush1.msra.mxu0 0.0
  %368 = vmatprep.subr.mxu0 0.0
  %369 = vmatpush1.msra.mxu0 0.0
  %370 = vmatprep.subr.mxu0 0.0
  %371 = vmatpush1.msra.mxu0 0.0
  %372 = vmatprep.subr.mxu0 0.0
  %373 = vmatpush1.msra.mxu0 0.0
  %374 = vmatprep.subr.mxu0 0.0
  %375 = vmatpush1.msra.mxu0 0.0
  %376 = vmatprep.subr.mxu0 0.0
  %377 = vmatpush1.msra.mxu0 0.0
  %378 = vmatprep.subr.mxu0 0.0
  %379 = vmatpush1.msra.mxu0 0.0
  %380 = vmatprep.subr.mxu0 0.0
  %381 = vmatpush1.msra.mxu0 0.0
  %382 = vmatprep.subr.mxu0 0.0
  %383 = vmatpush1.msra.mxu0 0.0
  %384 = vmatprep.subr.mxu0 0.0
  %385 = vmatpush1.msra.mxu0 0.0
  %386 = vmatprep.subr.mxu0 0.0
  %387 = vmatpush1.msra.mxu0 0.0
  %388 = vmatprep.subr.mxu0 0.0
  %389 = vmatpush1.msra.mxu0 0.0
  %390 = vmatprep.subr.mxu0 0.0
  %391 = vmatpush1.msra.mxu0 0.0
  %392 = vmatprep.mubr.f32.mxu0 0.0
  %393 = vmatmul.mubr.f32.gmra.mrb[0].mxu0 %v256
  %v394 = vpop.f32.mrb[0].mxu0
  %v395 = vadd.f32 0.0, %v394
  %v396 = vpop.f32.mrb[0].mxu0
  %397 = vdwg.mxu0
  %v398 = vld [vmem:[#allocation3] ss:$8 sm:$0x7]
  %v399 = vadd.f32 %v398, %v324
  %v400 = vxor.u32 %v399, 2147483648
  %v401 = vmul.f32 %v400, 1.442695
  %v402 = vpow.pop %v401
  %v403 = vadd.f32 %v402, 1.0
  %v404 = vrcp.pop %v403
  %v405 = vmul.f32 1.0, %v404
  %v407 = vrot.slane %v398, 1
  %v409 = vadd.f32 %v407, %v326
  %v410 = vxor.u32 %v409, 2147483648
  %v411 = vmul.f32 %v410, 1.442695
  %v412 = vpow.pop %v411
  %v413 = vadd.f32 %v412, 1.0
  %v414 = vrcp.pop %v413
  %v415 = vmul.f32 1.0, %v414
  %v416 = vadd.f32 %v395, %v255
  %v417 = vmul.f32 %v405, %v416
  %v418 = vrot.slane %v398, 2
  %v420 = vadd.f32 %v418, %v417
  %v421 = vtanh.pop %v420
  %v422 = vsub.f32 1.0, %v415
  %v423 = vmul.f32 %v422, %v421
  %v424 = vmul.f32 %v415, %v256
  %v425 = vadd.f32 %v423, %v424
  %426 = vst [vmem:[%s6] sm:$0x1] %v425
  %427 = vmatprep.subr.mxu0 %v208
  %428 = vmatpush1.msra.mxu0 %v207
  %429 = vmatprep.subr.mxu0 %v211
  %430 = vmatpush1.msra.mxu0 %v210
  %431 = vmatprep.subr.mxu0 %v214
  %432 = vmatpush1.msra.mxu0 %v213
  %433 = vmatprep.subr.mxu0 %v217
  %434 = vmatpush1.msra.mxu0 %v216
  %435 = vmatprep.subr.mxu0 %v220
  %436 = vmatpush1.msra.mxu0 %v219
  %437 = vmatprep.subr.mxu0 %v223
  %438 = vmatpush1.msra.mxu0 %v222
  %439 = vmatprep.subr.mxu0 %v226
  %440 = vmatpush1.msra.mxu0 %v225
  %441 = vmatprep.subr.mxu0 %v229
  %442 = vmatpush1.msra.mxu0 %v228
  %443 = vmatprep.subr.mxu0 %v232
  %444 = vmatpush1.msra.mxu0 %v231
  %445 = vmatprep.subr.mxu0 %v235
  %446 = vmatpush1.msra.mxu0 %v234
  %447 = vmatprep.subr.mxu0 %v238
  %448 = vmatpush1.msra.mxu0 %v237
  %449 = vmatprep.subr.mxu0 %v241
  %450 = vmatpush1.msra.mxu0 %v240
  %451 = vmatprep.subr.mxu0 %v244
  %452 = vmatpush1.msra.mxu0 %v243
  %453 = vmatprep.subr.mxu0 %v247
  %454 = vmatpush1.msra.mxu0 %v246
  %455 = vmatprep.subr.mxu0 %v250
  %456 = vmatpush1.msra.mxu0 %v249
  %457 = vmatprep.subr.mxu0 %v253
  %458 = vmatpush1.msra.mxu0 %v252
  %459 = vmatprep.subr.mxu0 0.0
  %460 = vmatpush1.msra.mxu0 0.0
  %461 = vmatprep.subr.mxu0 0.0
  %462 = vmatpush1.msra.mxu0 0.0
  %463 = vmatprep.subr.mxu0 0.0
  %464 = vmatpush1.msra.mxu0 0.0
  %465 = vmatprep.subr.mxu0 0.0
  %466 = vmatpush1.msra.mxu0 0.0
  %467 = vmatprep.subr.mxu0 0.0
  %468 = vmatpush1.msra.mxu0 0.0
  %469 = vmatprep.subr.mxu0 0.0
  %470 = vmatpush1.msra.mxu0 0.0
  %471 = vmatprep.subr.mxu0 0.0
  %472 = vmatpush1.msra.mxu0 0.0
  %473 = vmatprep.subr.mxu0 0.0
  %474 = vmatpush1.msra.mxu0 0.0
  %475 = vmatprep.subr.mxu0 0.0
  %476 = vmatpush1.msra.mxu0 0.0
  %477 = vmatprep.subr.mxu0 0.0
  %478 = vmatpush1.msra.mxu0 0.0
  %479 = vmatprep.subr.mxu0 0.0
  %480 = vmatpush1.msra.mxu0 0.0
  %481 = vmatprep.subr.mxu0 0.0
  %482 = vmatpush1.msra.mxu0 0.0
  %483 = vmatprep.subr.mxu0 0.0
  %484 = vmatpush1.msra.mxu0 0.0
  %485 = vmatprep.subr.mxu0 0.0
  %486 = vmatpush1.msra.mxu0 0.0
  %487 = vmatprep.subr.mxu0 0.0
  %488 = vmatpush1.msra.mxu0 0.0
  %489 = vmatprep.subr.mxu0 0.0
  %490 = vmatpush1.msra.mxu0 0.0
  %491 = vmatprep.mubr.f32.mxu0 0.0
  %492 = vmatmul.mubr.f32.gmra.mrb[0].mxu0 %v425
  %v493 = vpop.f32.mrb[0].mxu0
  %v494 = vadd.f32 0.0, %v493
  %v495 = vpop.f32.mrb[0].mxu0
  %v496 = vadd.f32 0.0, %v495
  %497 = vdwg.mxu0
  %498 = vmatprep.subr.mxu0 0.0
  %499 = vmatpush1.msra.mxu0 %v209
  %500 = vmatprep.subr.mxu0 0.0
  %501 = vmatpush1.msra.mxu0 %v212
  %502 = vmatprep.subr.mxu0 0.0
  %503 = vmatpush1.msra.mxu0 %v215
  %504 = vmatprep.subr.mxu0 0.0
  %505 = vmatpush1.msra.mxu0 %v218
  %506 = vmatprep.subr.mxu0 0.0
  %507 = vmatpush1.msra.mxu0 %v221
  %508 = vmatprep.subr.mxu0 0.0
  %509 = vmatpush1.msra.mxu0 %v224
  %510 = vmatprep.subr.mxu0 0.0
  %511 = vmatpush1.msra.mxu0 %v227
  %512 = vmatprep.subr.mxu0 0.0
  %513 = vmatpush1.msra.mxu0 %v230
  %514 = vmatprep.subr.mxu0 0.0
  %515 = vmatpush1.msra.mxu0 %v233
  %516 = vmatprep.subr.mxu0 0.0
  %517 = vmatpush1.msra.mxu0 %v236
  %518 = vmatprep.subr.mxu0 0.0
  %519 = vmatpush1.msra.mxu0 %v239
  %520 = vmatprep.subr.mxu0 0.0
  %521 = vmatpush1.msra.mxu0 %v242
  %522 = vmatprep.subr.mxu0 0.0
  %523 = vmatpush1.msra.mxu0 %v245
  %524 = vmatprep.subr.mxu0 0.0
  %525 = vmatpush1.msra.mxu0 %v248
  %526 = vmatprep.subr.mxu0 0.0
  %527 = vmatpush1.msra.mxu0 %v251
  %528 = vmatprep.subr.mxu0 0.0
  %529 = vmatpush1.msra.mxu0 %v254
  %530 = vmatprep.subr.mxu0 0.0
  %531 = vmatpush1.msra.mxu0 0.0
  %532 = vmatprep.subr.mxu0 0.0
  %533 = vmatpush1.msra.mxu0 0.0
  %534 = vmatprep.subr.mxu0 0.0
  %535 = vmatpush1.msra.mxu0 0.0
  %536 = vmatprep.subr.mxu0 0.0
  %537 = vmatpush1.msra.mxu0 0.0
  %538 = vmatprep.subr.mxu0 0.0
  %539 = vmatpush1.msra.mxu0 0.0
  %540 = vmatprep.subr.mxu0 0.0
  %541 = vmatpush1.msra.mxu0 0.0
  %542 = vmatprep.subr.mxu0 0.0
  %543 = vmatpush1.msra.mxu0 0.0
  %544 = vmatprep.subr.mxu0 0.0
  %545 = vmatpush1.msra.mxu0 0.0
  %546 = vmatprep.subr.mxu0 0.0
  %547 = vmatpush1.msra.mxu0 0.0
  %548 = vmatprep.subr.mxu0 0.0
  %549 = vmatpush1.msra.mxu0 0.0
  %550 = vmatprep.subr.mxu0 0.0
  %551 = vmatpush1.msra.mxu0 0.0
  %552 = vmatprep.subr.mxu0 0.0
  %553 = vmatpush1.msra.mxu0 0.0
  %554 = vmatprep.subr.mxu0 0.0
  %555 = vmatpush1.msra.mxu0 0.0
  %556 = vmatprep.subr.mxu0 0.0
  %557 = vmatpush1.msra.mxu0 0.0
  %558 = vmatprep.subr.mxu0 0.0
  %559 = vmatpush1.msra.mxu0 0.0
  %560 = vmatprep.subr.mxu0 0.0
  %561 = vmatpush1.msra.mxu0 0.0
  %562 = vmatprep.mubr.f32.mxu0 0.0
  %563 = vmatmul.mubr.f32.gmra.mrb[0].mxu0 %v425
  %v564 = vpop.f32.mrb[0].mxu0
  %v565 = vadd.f32 0.0, %v564
  %v566 = vpop.f32.mrb[0].mxu0
  %567 = vdwg.mxu0
  %s568 = scalar_lea.vmem [#allocation3], 1
  %v569 = vld [vmem:[%s568] ss:$8 sm:$0x7]
  %v570 = vadd.f32 %v569, %v494
  %v571 = vxor.u32 %v570, 2147483648
  %v572 = vmul.f32 %v571, 1.442695
  %v573 = vpow.pop %v572
  %v574 = vadd.f32 %v573, 1.0
  %v575 = vrcp.pop %v574
  %v576 = vmul.f32 1.0, %v575
  %v578 = vrot.slane %v569, 1
  %v580 = vadd.f32 %v578, %v496
  %v581 = vxor.u32 %v580, 2147483648
  %v582 = vmul.f32 %v581, 1.442695
  %v583 = vpow.pop %v582
  %v584 = vadd.f32 %v583, 1.0
  %v585 = vrcp.pop %v584
  %v586 = vmul.f32 1.0, %v585
  %v587 = vadd.f32 %v565, %v255
  %v588 = vmul.f32 %v576, %v587
  %v589 = vrot.slane %v569, 2
  %v591 = vadd.f32 %v589, %v588
  %v592 = vtanh.pop %v591
  %v593 = vsub.f32 1.0, %v586
  %v594 = vmul.f32 %v593, %v592
  %v595 = vmul.f32 %v586, %v425
  %v596 = vadd.f32 %v594, %v595
  %597 = vst [vmem:[%s6 + $0x1] sm:$0x1] %v596
  %598 = vmatprep.subr.mxu0 %v208
  %599 = vmatpush1.msra.mxu0 %v207
  %600 = vmatprep.subr.mxu0 %v211
  %601 = vmatpush1.msra.mxu0 %v210
  %602 = vmatprep.subr.mxu0 %v214
  %603 = vmatpush1.msra.mxu0 %v213
  %604 = vmatprep.subr.mxu0 %v217
  %605 = vmatpush1.msra.mxu0 %v216
  %606 = vmatprep.subr.mxu0 %v220
  %607 = vmatpush1.msra.mxu0 %v219
  %608 = vmatprep.subr.mxu0 %v223
  %609 = vmatpush1.msra.mxu0 %v222
  %610 = vmatprep.subr.mxu0 %v226
  %611 = vmatpush1.msra.mxu0 %v225
  %612 = vmatprep.subr.mxu0 %v229
  %613 = vmatpush1.msra.mxu0 %v228
  %614 = vmatprep.subr.mxu0 %v232
  %615 = vmatpush1.msra.mxu0 %v231
  %616 = vmatprep.subr.mxu0 %v235
  %617 = vmatpush1.msra.mxu0 %v234
  %618 = vmatprep.subr.mxu0 %v238
  %619 = vmatpush1.msra.mxu0 %v237
  %620 = vmatprep.subr.mxu0 %v241
  %621 = vmatpush1.msra.mxu0 %v240
  %622 = vmatprep.subr.mxu0 %v244
  %623 = vmatpush1.msra.mxu0 %v243
  %624 = vmatprep.subr.mxu0 %v247
  %625 = vmatpush1.msra.mxu0 %v246
  %626 = vmatprep.subr.mxu0 %v250
  %627 = vmatpush1.msra.mxu0 %v249
  %628 = vmatprep.subr.mxu0 %v253
  %629 = vmatpush1.msra.mxu0 %v252
  %630 = vmatprep.subr.mxu0 0.0
  %631 = vmatpush1.msra.mxu0 0.0
  %632 = vmatprep.subr.mxu0 0.0
  %633 = vmatpush1.msra.mxu0 0.0
  %634 = vmatprep.subr.mxu0 0.0
  %635 = vmatpush1.msra.mxu0 0.0
  %636 = vmatprep.subr.mxu0 0.0
  %637 = vmatpush1.msra.mxu0 0.0
  %638 = vmatprep.subr.mxu0 0.0
  %639 = vmatpush1.msra.mxu0 0.0
  %640 = vmatprep.subr.mxu0 0.0
  %641 = vmatpush1.msra.mxu0 0.0
  %642 = vmatprep.subr.mxu0 0.0
  %643 = vmatpush1.msra.mxu0 0.0
  %644 = vmatprep.subr.mxu0 0.0
  %645 = vmatpush1.msra.mxu0 0.0
  %646 = vmatprep.subr.mxu0 0.0
  %647 = vmatpush1.msra.mxu0 0.0
  %648 = vmatprep.subr.mxu0 0.0
  %649 = vmatpush1.msra.mxu0 0.0
  %650 = vmatprep.subr.mxu0 0.0
  %651 = vmatpush1.msra.mxu0 0.0
  %652 = vmatprep.subr.mxu0 0.0
  %653 = vmatpush1.msra.mxu0 0.0
  %654 = vmatprep.subr.mxu0 0.0
  %655 = vmatpush1.msra.mxu0 0.0
  %656 = vmatprep.subr.mxu0 0.0
  %657 = vmatpush1.msra.mxu0 0.0
  %658 = vmatprep.subr.mxu0 0.0
  %659 = vmatpush1.msra.mxu0 0.0
  %660 = vmatprep.subr.mxu0 0.0
  %661 = vmatpush1.msra.mxu0 0.0
  %662 = vmatprep.mubr.f32.mxu0 0.0
  %663 = vmatmul.mubr.f32.gmra.mrb[0].mxu0 %v596
  %v664 = vpop.f32.mrb[0].mxu0
  %v665 = vadd.f32 0.0, %v664
  %v666 = vpop.f32.mrb[0].mxu0
  %v667 = vadd.f32 0.0, %v666
  %668 = vdwg.mxu0
  %669 = vmatprep.subr.mxu0 0.0
  %670 = vmatpush1.msra.mxu0 %v209
  %671 = vmatprep.subr.mxu0 0.0
  %672 = vmatpush1.msra.mxu0 %v212
  %673 = vmatprep.subr.mxu0 0.0
  %674 = vmatpush1.msra.mxu0 %v215
  %675 = vmatprep.subr.mxu0 0.0
  %676 = vmatpush1.msra.mxu0 %v218
  %677 = vmatprep.subr.mxu0 0.0
  %678 = vmatpush1.msra.mxu0 %v221
  %679 = vmatprep.subr.mxu0 0.0
  %680 = vmatpush1.msra.mxu0 %v224
  %681 = vmatprep.subr.mxu0 0.0
  %682 = vmatpush1.msra.mxu0 %v227
  %683 = vmatprep.subr.mxu0 0.0
  %684 = vmatpush1.msra.mxu0 %v230
  %685 = vmatprep.subr.mxu0 0.0
  %686 = vmatpush1.msra.mxu0 %v233
  %687 = vmatprep.subr.mxu0 0.0
  %688 = vmatpush1.msra.mxu0 %v236
  %689 = vmatprep.subr.mxu0 0.0
  %690 = vmatpush1.msra.mxu0 %v239
  %691 = vmatprep.subr.mxu0 0.0
  %692 = vmatpush1.msra.mxu0 %v242
  %693 = vmatprep.subr.mxu0 0.0
  %694 = vmatpush1.msra.mxu0 %v245
  %695 = vmatprep.subr.mxu0 0.0
  %696 = vmatpush1.msra.mxu0 %v248
  %697 = vmatprep.subr.mxu0 0.0
  %698 = vmatpush1.msra.mxu0 %v251
  %699 = vmatprep.subr.mxu0 0.0
  %700 = vmatpush1.msra.mxu0 %v254
  %701 = vmatprep.subr.mxu0 0.0
  %702 = vmatpush1.msra.mxu0 0.0
  %703 = vmatprep.subr.mxu0 0.0
  %704 = vmatpush1.msra.mxu0 0.0
  %705 = vmatprep.subr.mxu0 0.0
  %706 = vmatpush1.msra.mxu0 0.0
  %707 = vmatprep.subr.mxu0 0.0
  %708 = vmatpush1.msra.mxu0 0.0
  %709 = vmatprep.subr.mxu0 0.0
  %710 = vmatpush1.msra.mxu0 0.0
  %711 = vmatprep.subr.mxu0 0.0
  %712 = vmatpush1.msra.mxu0 0.0
  %713 = vmatprep.subr.mxu0 0.0
  %714 = vmatpush1.msra.mxu0 0.0
  %715 = vmatprep.subr.mxu0 0.0
  %716 = vmatpush1.msra.mxu0 0.0
  %717 = vmatprep.subr.mxu0 0.0
  %718 = vmatpush1.msra.mxu0 0.0
  %719 = vmatprep.subr.mxu0 0.0
  %720 = vmatpush1.msra.mxu0 0.0
  %721 = vmatprep.subr.mxu0 0.0
  %722 = vmatpush1.msra.mxu0 0.0
  %723 = vmatprep.subr.mxu0 0.0
  %724 = vmatpush1.msra.mxu0 0.0
  %725 = vmatprep.subr.mxu0 0.0
  %726 = vmatpush1.msra.mxu0 0.0
  %727 = vmatprep.subr.mxu0 0.0
  %728 = vmatpush1.msra.mxu0 0.0
  %729 = vmatprep.subr.mxu0 0.0
  %730 = vmatpush1.msra.mxu0 0.0
  %731 = vmatprep.subr.mxu0 0.0
  %732 = vmatpush1.msra.mxu0 0.0
  %733 = vmatprep.mubr.f32.mxu0 0.0
  %734 = vmatmul.mubr.f32.gmra.mrb[0].mxu0 %v596
  %v735 = vpop.f32.mrb[0].mxu0
  %v736 = vadd.f32 0.0, %v735
  %v737 = vpop.f32.mrb[0].mxu0
  %738 = vdwg.mxu0
  %s739 = scalar_lea.vmem [#allocation3], 2
  %v740 = vld [vmem:[%s739] ss:$8 sm:$0x7]
  %v741 = vadd.f32 %v740, %v665
  %v742 = vxor.u32 %v741, 2147483648
  %v743 = vmul.f32 %v742, 1.442695
  %v744 = vpow.pop %v743
  %v745 = vadd.f32 %v744, 1.0
  %v746 = vrcp.pop %v745
  %v747 = vmul.f32 1.0, %v746
  %v749 = vrot.slane %v740, 1
  %v751 = vadd.f32 %v749, %v667
  %v752 = vxor.u32 %v751, 2147483648
  %v753 = vmul.f32 %v752, 1.442695
  %v754 = vpow.pop %v753
  %v755 = vadd.f32 %v754, 1.0
  %v756 = vrcp.pop %v755
  %v757 = vmul.f32 1.0, %v756
  %v758 = vadd.f32 %v736, %v255
  %v759 = vmul.f32 %v747, %v758
  %v760 = vrot.slane %v740, 2
  %v762 = vadd.f32 %v760, %v759
  %v763 = vtanh.pop %v762
  %v764 = vsub.f32 1.0, %v757
  %v765 = vmul.f32 %v764, %v763
  %v766 = vmul.f32 %v757, %v596
  %v767 = vadd.f32 %v765, %v766
  %768 = vst [vmem:[%s6 + $0x2] sm:$0x1] %v767
  %769 = vmatprep.subr.mxu0 %v208
  %770 = vmatpush1.msra.mxu0 %v207
  %771 = vmatprep.subr.mxu0 %v211
  %772 = vmatpush1.msra.mxu0 %v210
  %773 = vmatprep.subr.mxu0 %v214
  %774 = vmatpush1.msra.mxu0 %v213
  %775 = vmatprep.subr.mxu0 %v217
  %776 = vmatpush1.msra.mxu0 %v216
  %777 = vmatprep.subr.mxu0 %v220
  %778 = vmatpush1.msra.mxu0 %v219
  %779 = vmatprep.subr.mxu0 %v223
  %780 = vmatpush1.msra.mxu0 %v222
  %781 = vmatprep.subr.mxu0 %v226
  %782 = vmatpush1.msra.mxu0 %v225
  %783 = vmatprep.subr.mxu0 %v229
  %784 = vmatpush1.msra.mxu0 %v228
  %785 = vmatprep.subr.mxu0 %v232
  %786 = vmatpush1.msra.mxu0 %v231
  %787 = vmatprep.subr.mxu0 %v235
  %788 = vmatpush1.msra.mxu0 %v234
  %789 = vmatprep.subr.mxu0 %v238
  %790 = vmatpush1.msra.mxu0 %v237
  %791 = vmatprep.subr.mxu0 %v241
  %792 = vmatpush1.msra.mxu0 %v240
  %793 = vmatprep.subr.mxu0 %v244
  %794 = vmatpush1.msra.mxu0 %v243
  %795 = vmatprep.subr.mxu0 %v247
  %796 = vmatpush1.msra.mxu0 %v246
  %797 = vmatprep.subr.mxu0 %v250
  %798 = vmatpush1.msra.mxu0 %v249
  %799 = vmatprep.subr.mxu0 %v253
  %800 = vmatpush1.msra.mxu0 %v252
  %801 = vmatprep.subr.mxu0 0.0
  %802 = vmatpush1.msra.mxu0 0.0
  %803 = vmatprep.subr.mxu0 0.0
  %804 = vmatpush1.msra.mxu0 0.0
  %805 = vmatprep.subr.mxu0 0.0
  %806 = vmatpush1.msra.mxu0 0.0
  %807 = vmatprep.subr.mxu0 0.0
  %808 = vmatpush1.msra.mxu0 0.0
  %809 = vmatprep.subr.mxu0 0.0
  %810 = vmatpush1.msra.mxu0 0.0
  %811 = vmatprep.subr.mxu0 0.0
  %812 = vmatpush1.msra.mxu0 0.0
  %813 = vmatprep.subr.mxu0 0.0
  %814 = vmatpush1.msra.mxu0 0.0
  %815 = vmatprep.subr.mxu0 0.0
  %816 = vmatpush1.msra.mxu0 0.0
  %817 = vmatprep.subr.mxu0 0.0
  %818 = vmatpush1.msra.mxu0 0.0
  %819 = vmatprep.subr.mxu0 0.0
  %820 = vmatpush1.msra.mxu0 0.0
  %821 = vmatprep.subr.mxu0 0.0
  %822 = vmatpush1.msra.mxu0 0.0
  %823 = vmatprep.subr.mxu0 0.0
  %824 = vmatpush1.msra.mxu0 0.0
  %825 = vmatprep.subr.mxu0 0.0
  %826 = vmatpush1.msra.mxu0 0.0
  %827 = vmatprep.subr.mxu0 0.0
  %828 = vmatpush1.msra.mxu0 0.0
  %829 = vmatprep.subr.mxu0 0.0
  %830 = vmatpush1.msra.mxu0 0.0
  %831 = vmatprep.subr.mxu0 0.0
  %832 = vmatpush1.msra.mxu0 0.0
  %833 = vmatprep.mubr.f32.mxu0 0.0
  %834 = vmatmul.mubr.f32.gmra.mrb[0].mxu0 %v767
  %v835 = vpop.f32.mrb[0].mxu0
  %v836 = vadd.f32 0.0, %v835
  %v837 = vpop.f32.mrb[0].mxu0
  %v838 = vadd.f32 0.0, %v837
  %839 = vdwg.mxu0
  %840 = vmatprep.subr.mxu0 0.0
  %841 = vmatpush1.msra.mxu0 %v209
  %842 = vmatprep.subr.mxu0 0.0
  %843 = vmatpush1.msra.mxu0 %v212
  %844 = vmatprep.subr.mxu0 0.0
  %845 = vmatpush1.msra.mxu0 %v215
  %846 = vmatprep.subr.mxu0 0.0
  %847 = vmatpush1.msra.mxu0 %v218
  %848 = vmatprep.subr.mxu0 0.0
  %849 = vmatpush1.msra.mxu0 %v221
  %850 = vmatprep.subr.mxu0 0.0
  %851 = vmatpush1.msra.mxu0 %v224
  %852 = vmatprep.subr.mxu0 0.0
  %853 = vmatpush1.msra.mxu0 %v227
  %854 = vmatprep.subr.mxu0 0.0
  %855 = vmatpush1.msra.mxu0 %v230
  %856 = vmatprep.subr.mxu0 0.0
  %857 = vmatpush1.msra.mxu0 %v233
  %858 = vmatprep.subr.mxu0 0.0
  %859 = vmatpush1.msra.mxu0 %v236
  %860 = vmatprep.subr.mxu0 0.0
  %861 = vmatpush1.msra.mxu0 %v239
  %862 = vmatprep.subr.mxu0 0.0
  %863 = vmatpush1.msra.mxu0 %v242
  %864 = vmatprep.subr.mxu0 0.0
  %865 = vmatpush1.msra.mxu0 %v245
  %866 = vmatprep.subr.mxu0 0.0
  %867 = vmatpush1.msra.mxu0 %v248
  %868 = vmatprep.subr.mxu0 0.0
  %869 = vmatpush1.msra.mxu0 %v251
  %870 = vmatprep.subr.mxu0 0.0
  %871 = vmatpush1.msra.mxu0 %v254
  %872 = vmatprep.subr.mxu0 0.0
  %873 = vmatpush1.msra.mxu0 0.0
  %874 = vmatprep.subr.mxu0 0.0
  %875 = vmatpush1.msra.mxu0 0.0
  %876 = vmatprep.subr.mxu0 0.0
  %877 = vmatpush1.msra.mxu0 0.0
  %878 = vmatprep.subr.mxu0 0.0
  %879 = vmatpush1.msra.mxu0 0.0
  %880 = vmatprep.subr.mxu0 0.0
  %881 = vmatpush1.msra.mxu0 0.0
  %882 = vmatprep.subr.mxu0 0.0
  %883 = vmatpush1.msra.mxu0 0.0
  %884 = vmatprep.subr.mxu0 0.0
  %885 = vmatpush1.msra.mxu0 0.0
  %886 = vmatprep.subr.mxu0 0.0
  %887 = vmatpush1.msra.mxu0 0.0
  %888 = vmatprep.subr.mxu0 0.0
  %889 = vmatpush1.msra.mxu0 0.0
  %890 = vmatprep.subr.mxu0 0.0
  %891 = vmatpush1.msra.mxu0 0.0
  %892 = vmatprep.subr.mxu0 0.0
  %893 = vmatpush1.msra.mxu0 0.0
  %894 = vmatprep.subr.mxu0 0.0
  %895 = vmatpush1.msra.mxu0 0.0
  %896 = vmatprep.subr.mxu0 0.0
  %897 = vmatpush1.msra.mxu0 0.0
  %898 = vmatprep.subr.mxu0 0.0
  %899 = vmatpush1.msra.mxu0 0.0
  %900 = vmatprep.subr.mxu0 0.0
  %901 = vmatpush1.msra.mxu0 0.0
  %902 = vmatprep.subr.mxu0 0.0
  %903 = vmatpush1.msra.mxu0 0.0
  %904 = vmatprep.mubr.f32.mxu0 0.0
  %905 = vmatmul.mubr.f32.gmra.mrb[0].mxu0 %v767
  %v906 = vpop.f32.mrb[0].mxu0
  %v907 = vadd.f32 0.0, %v906
  %v908 = vpop.f32.mrb[0].mxu0
  %909 = vdwg.mxu0
  %s910 = scalar_lea.vmem [#allocation3], 3
  %v911 = vld [vmem:[%s910] ss:$8 sm:$0x7]
  %v912 = vadd.f32 %v911, %v836
  %v913 = vxor.u32 %v912, 2147483648
  %v914 = vmul.f32 %v913, 1.442695
  %v915 = vpow.pop %v914
  %v916 = vadd.f32 %v915, 1.0
  %v917 = vrcp.pop %v916
  %v918 = vmul.f32 1.0, %v917
  %v920 = vrot.slane %v911, 1
  %v922 = vadd.f32 %v920, %v838
  %v923 = vxor.u32 %v922, 2147483648
  %v924 = vmul.f32 %v923, 1.442695
  %v925 = vpow.pop %v924
  %v926 = vadd.f32 %v925, 1.0
  %v927 = vrcp.pop %v926
  %v928 = vmul.f32 1.0, %v927
  %v929 = vadd.f32 %v907, %v255
  %v930 = vmul.f32 %v918, %v929
  %v931 = vrot.slane %v911, 2
  %v933 = vadd.f32 %v931, %v930
  %v934 = vtanh.pop %v933
  %v935 = vsub.f32 1.0, %v928
  %v936 = vmul.f32 %v935, %v934
  %v937 = vmul.f32 %v928, %v767
  %v938 = vadd.f32 %v936, %v937
  %939 = vst [vmem:[%s6 + $0x3] sm:$0x1] %v938
  %940 = vmatprep.subr.mxu0 %v208
  %941 = vmatpush1.msra.mxu0 %v207
  %942 = vmatprep.subr.mxu0 %v211
  %943 = vmatpush1.msra.mxu0 %v210
  %944 = vmatprep.subr.mxu0 %v214
  %945 = vmatpush1.msra.mxu0 %v213
  %946 = vmatprep.subr.mxu0 %v217
  %947 = vmatpush1.msra.mxu0 %v216
  %948 = vmatprep.subr.mxu0 %v220
  %949 = vmatpush1.msra.mxu0 %v219
  %950 = vmatprep.subr.mxu0 %v223
  %951 = vmatpush1.msra.mxu0 %v222
  %952 = vmatprep.subr.mxu0 %v226
  %953 = vmatpush1.msra.mxu0 %v225
  %954 = vmatprep.subr.mxu0 %v229
  %955 = vmatpush1.msra.mxu0 %v228
  %956 = vmatprep.subr.mxu0 %v232
  %957 = vmatpush1.msra.mxu0 %v231
  %958 = vmatprep.subr.mxu0 %v235
  %959 = vmatpush1.msra.mxu0 %v234
  %960 = vmatprep.subr.mxu0 %v238
  %961 = vmatpush1.msra.mxu0 %v237
  %962 = vmatprep.subr.mxu0 %v241
  %963 = vmatpush1.msra.mxu0 %v240
  %964 = vmatprep.subr.mxu0 %v244
  %965 = vmatpush1.msra.mxu0 %v243
  %966 = vmatprep.subr.mxu0 %v247
  %967 = vmatpush1.msra.mxu0 %v246
  %968 = vmatprep.subr.mxu0 %v250
  %969 = vmatpush1.msra.mxu0 %v249
  %970 = vmatprep.subr.mxu0 %v253
  %971 = vmatpush1.msra.mxu0 %v252
  %972 = vmatprep.subr.mxu0 0.0
  %973 = vmatpush1.msra.mxu0 0.0
  %974 = vmatprep.subr.mxu0 0.0
  %975 = vmatpush1.msra.mxu0 0.0
  %976 = vmatprep.subr.mxu0 0.0
  %977 = vmatpush1.msra.mxu0 0.0
  %978 = vmatprep.subr.mxu0 0.0
  %979 = vmatpush1.msra.mxu0 0.0
  %980 = vmatprep.subr.mxu0 0.0
  %981 = vmatpush1.msra.mxu0 0.0
  %982 = vmatprep.subr.mxu0 0.0
  %983 = vmatpush1.msra.mxu0 0.0
  %984 = vmatprep.subr.mxu0 0.0
  %985 = vmatpush1.msra.mxu0 0.0
  %986 = vmatprep.subr.mxu0 0.0
  %987 = vmatpush1.msra.mxu0 0.0
  %988 = vmatprep.subr.mxu0 0.0
  %989 = vmatpush1.msra.mxu0 0.0
  %990 = vmatprep.subr.mxu0 0.0
  %991 = vmatpush1.msra.mxu0 0.0
  %992 = vmatprep.subr.mxu0 0.0
  %993 = vmatpush1.msra.mxu0 0.0
  %994 = vmatprep.subr.mxu0 0.0
  %995 = vmatpush1.msra.mxu0 0.0
  %996 = vmatprep.subr.mxu0 0.0
  %997 = vmatpush1.msra.mxu0 0.0
  %998 = vmatprep.subr.mxu0 0.0
  %999 = vmatpush1.msra.mxu0 0.0
  %1000 = vmatprep.subr.mxu0 0.0
  %1001 = vmatpush1.msra.mxu0 0.0
  %1002 = vmatprep.subr.mxu0 0.0
  %1003 = vmatpush1.msra.mxu0 0.0
  %1004 = vmatprep.mubr.f32.mxu0 0.0
  %1005 = vmatmul.mubr.f32.gmra.mrb[0].mxu0 %v938
  %v1006 = vpop.f32.mrb[0].mxu0
  %v1007 = vadd.f32 0.0, %v1006
  %v1008 = vpop.f32.mrb[0].mxu0
  %v1009 = vadd.f32 0.0, %v1008
  %1010 = vdwg.mxu0
  %1011 = vmatprep.subr.mxu0 0.0
  %1012 = vmatpush1.msra.mxu0 %v209
  %1013 = vmatprep.subr.mxu0 0.0
  %1014 = vmatpush1.msra.mxu0 %v212
  %1015 = vmatprep.subr.mxu0 0.0
  %1016 = vmatpush1.msra.mxu0 %v215
  %1017 = vmatprep.subr.mxu0 0.0
  %1018 = vmatpush1.msra.mxu0 %v218
  %1019 = vmatprep.subr.mxu0 0.0
  %1020 = vmatpush1.msra.mxu0 %v221
  %1021 = vmatprep.subr.mxu0 0.0
  %1022 = vmatpush1.msra.mxu0 %v224
  %1023 = vmatprep.subr.mxu0 0.0
  %1024 = vmatpush1.msra.mxu0 %v227
  %1025 = vmatprep.subr.mxu0 0.0
  %1026 = vmatpush1.msra.mxu0 %v230
  %1027 = vmatprep.subr.mxu0 0.0
  %1028 = vmatpush1.msra.mxu0 %v233
  %1029 = vmatprep.subr.mxu0 0.0
  %1030 = vmatpush1.msra.mxu0 %v236
  %1031 = vmatprep.subr.mxu0 0.0
  %1032 = vmatpush1.msra.mxu0 %v239
  %1033 = vmatprep.subr.mxu0 0.0
  %1034 = vmatpush1.msra.mxu0 %v242
  %1035 = vmatprep.subr.mxu0 0.0
  %1036 = vmatpush1.msra.mxu0 %v245
  %1037 = vmatprep.subr.mxu0 0.0
  %1038 = vmatpush1.msra.mxu0 %v248
  %1039 = vmatprep.subr.mxu0 0.0
  %1040 = vmatpush1.msra.mxu0 %v251
  %1041 = vmatprep.subr.mxu0 0.0
  %1042 = vmatpush1.msra.mxu0 %v254
  %1043 = vmatprep.subr.mxu0 0.0
  %1044 = vmatpush1.msra.mxu0 0.0
  %1045 = vmatprep.subr.mxu0 0.0
  %1046 = vmatpush1.msra.mxu0 0.0
  %1047 = vmatprep.subr.mxu0 0.0
  %1048 = vmatpush1.msra.mxu0 0.0
  %1049 = vmatprep.subr.mxu0 0.0
  %1050 = vmatpush1.msra.mxu0 0.0
  %1051 = vmatprep.subr.mxu0 0.0
  %1052 = vmatpush1.msra.mxu0 0.0
  %1053 = vmatprep.subr.mxu0 0.0
  %1054 = vmatpush1.msra.mxu0 0.0
  %1055 = vmatprep.subr.mxu0 0.0
  %1056 = vmatpush1.msra.mxu0 0.0
  %1057 = vmatprep.subr.mxu0 0.0
  %1058 = vmatpush1.msra.mxu0 0.0
  %1059 = vmatprep.subr.mxu0 0.0
  %1060 = vmatpush1.msra.mxu0 0.0
  %1061 = vmatprep.subr.mxu0 0.0
  %1062 = vmatpush1.msra.mxu0 0.0
  %1063 = vmatprep.subr.mxu0 0.0
  %1064 = vmatpush1.msra.mxu0 0.0
  %1065 = vmatprep.subr.mxu0 0.0
  %1066 = vmatpush1.msra.mxu0 0.0
  %1067 = vmatprep.subr.mxu0 0.0
  %1068 = vmatpush1.msra.mxu0 0.0
  %1069 = vmatprep.subr.mxu0 0.0
  %1070 = vmatpush1.msra.mxu0 0.0
  %1071 = vmatprep.subr.mxu0 0.0
  %1072 = vmatpush1.msra.mxu0 0.0
  %1073 = vmatprep.subr.mxu0 0.0
  %1074 = vmatpush1.msra.mxu0 0.0
  %1075 = vmatprep.mubr.f32.mxu0 0.0
  %1076 = vmatmul.mubr.f32.gmra.mrb[0].mxu0 %v938
  %v1077 = vpop.f32.mrb[0].mxu0
  %v1078 = vadd.f32 0.0, %v1077
  %v1079 = vpop.f32.mrb[0].mxu0
  %1080 = vdwg.mxu0
  %s1081 = scalar_lea.vmem [#allocation3], 4
  %v1082 = vld [vmem:[%s1081] ss:$8 sm:$0x7]
  %v1083 = vadd.f32 %v1082, %v1007
  %v1084 = vxor.u32 %v1083, 2147483648
  %v1085 = vmul.f32 %v1084, 1.442695
  %v1086 = vpow.pop %v1085
  %v1087 = vadd.f32 %v1086, 1.0
  %v1088 = vrcp.pop %v1087
  %v1089 = vmul.f32 1.0, %v1088
  %v1091 = vrot.slane %v1082, 1
  %v1093 = vadd.f32 %v1091, %v1009
  %v1094 = vxor.u32 %v1093, 2147483648
  %v1095 = vmul.f32 %v1094, 1.442695
  %v1096 = vpow.pop %v1095
  %v1097 = vadd.f32 %v1096, 1.0
  %v1098 = vrcp.pop %v1097
  %v1099 = vmul.f32 1.0, %v1098
  %v1100 = vadd.f32 %v1078, %v255
  %v1101 = vmul.f32 %v1089, %v1100
  %v1102 = vrot.slane %v1082, 2
  %v1104 = vadd.f32 %v1102, %v1101
  %v1105 = vtanh.pop %v1104
  %v1106 = vsub.f32 1.0, %v1099
  %v1107 = vmul.f32 %v1106, %v1105
  %v1108 = vmul.f32 %v1099, %v938
  %v1109 = vadd.f32 %v1107, %v1108
  %1110 = vst [vmem:[%s6 + $0x4] sm:$0x1] %v1109
  %1111 = vmatprep.subr.mxu0 %v208
  %1112 = vmatpush1.msra.mxu0 %v207
  %1113 = vmatprep.subr.mxu0 %v211
  %1114 = vmatpush1.msra.mxu0 %v210
  %1115 = vmatprep.subr.mxu0 %v214
  %1116 = vmatpush1.msra.mxu0 %v213
  %1117 = vmatprep.subr.mxu0 %v217
  %1118 = vmatpush1.msra.mxu0 %v216
  %1119 = vmatprep.subr.mxu0 %v220
  %1120 = vmatpush1.msra.mxu0 %v219
  %1121 = vmatprep.subr.mxu0 %v223
  %1122 = vmatpush1.msra.mxu0 %v222
  %1123 = vmatprep.subr.mxu0 %v226
  %1124 = vmatpush1.msra.mxu0 %v225
  %1125 = vmatprep.subr.mxu0 %v229
  %1126 = vmatpush1.msra.mxu0 %v228
  %1127 = vmatprep.subr.mxu0 %v232
  %1128 = vmatpush1.msra.mxu0 %v231
  %1129 = vmatprep.subr.mxu0 %v235
  %1130 = vmatpush1.msra.mxu0 %v234
  %1131 = vmatprep.subr.mxu0 %v238
  %1132 = vmatpush1.msra.mxu0 %v237
  %1133 = vmatprep.subr.mxu0 %v241
  %1134 = vmatpush1.msra.mxu0 %v240
  %1135 = vmatprep.subr.mxu0 %v244
  %1136 = vmatpush1.msra.mxu0 %v243
  %1137 = vmatprep.subr.mxu0 %v247
  %1138 = vmatpush1.msra.mxu0 %v246
  %1139 = vmatprep.subr.mxu0 %v250
  %1140 = vmatpush1.msra.mxu0 %v249
  %1141 = vmatprep.subr.mxu0 %v253
  %1142 = vmatpush1.msra.mxu0 %v252
  %1143 = vmatprep.subr.mxu0 0.0
  %1144 = vmatpush1.msra.mxu0 0.0
  %1145 = vmatprep.subr.mxu0 0.0
  %1146 = vmatpush1.msra.mxu0 0.0
  %1147 = vmatprep.subr.mxu0 0.0
  %1148 = vmatpush1.msra.mxu0 0.0
  %1149 = vmatprep.subr.mxu0 0.0
  %1150 = vmatpush1.msra.mxu0 0.0
  %1151 = vmatprep.subr.mxu0 0.0
  %1152 = vmatpush1.msra.mxu0 0.0
  %1153 = vmatprep.subr.mxu0 0.0
  %1154 = vmatpush1.msra.mxu0 0.0
  %1155 = vmatprep.subr.mxu0 0.0
  %1156 = vmatpush1.msra.mxu0 0.0
  %1157 = vmatprep.subr.mxu0 0.0
  %1158 = vmatpush1.msra.mxu0 0.0
  %1159 = vmatprep.subr.mxu0 0.0
  %1160 = vmatpush1.msra.mxu0 0.0
  %1161 = vmatprep.subr.mxu0 0.0
  %1162 = vmatpush1.msra.mxu0 0.0
  %1163 = vmatprep.subr.mxu0 0.0
  %1164 = vmatpush1.msra.mxu0 0.0
  %1165 = vmatprep.subr.mxu0 0.0
  %1166 = vmatpush1.msra.mxu0 0.0
  %1167 = vmatprep.subr.mxu0 0.0
  %1168 = vmatpush1.msra.mxu0 0.0
  %1169 = vmatprep.subr.mxu0 0.0
  %1170 = vmatpush1.msra.mxu0 0.0
  %1171 = vmatprep.subr.mxu0 0.0
  %1172 = vmatpush1.msra.mxu0 0.0
  %1173 = vmatprep.subr.mxu0 0.0
  %1174 = vmatpush1.msra.mxu0 0.0
  %1175 = vmatprep.mubr.f32.mxu0 0.0
  %1176 = vmatmul.mubr.f32.gmra.mrb[0].mxu0 %v1109
  %v1177 = vpop.f32.mrb[0].mxu0
  %v1178 = vadd.f32 0.0, %v1177
  %v1179 = vpop.f32.mrb[0].mxu0
  %v1180 = vadd.f32 0.0, %v1179
  %1181 = vdwg.mxu0
  %1182 = vmatprep.subr.mxu0 0.0
  %1183 = vmatpush1.msra.mxu0 %v209
  %1184 = vmatprep.subr.mxu0 0.0
  %1185 = vmatpush1.msra.mxu0 %v212
  %1186 = vmatprep.subr.mxu0 0.0
  %1187 = vmatpush1.msra.mxu0 %v215
  %1188 = vmatprep.subr.mxu0 0.0
  %1189 = vmatpush1.msra.mxu0 %v218
  %1190 = vmatprep.subr.mxu0 0.0
  %1191 = vmatpush1.msra.mxu0 %v221
  %1192 = vmatprep.subr.mxu0 0.0
  %1193 = vmatpush1.msra.mxu0 %v224
  %1194 = vmatprep.subr.mxu0 0.0
  %1195 = vmatpush1.msra.mxu0 %v227
  %1196 = vmatprep.subr.mxu0 0.0
  %1197 = vmatpush1.msra.mxu0 %v230
  %1198 = vmatprep.subr.mxu0 0.0
  %1199 = vmatpush1.msra.mxu0 %v233
  %1200 = vmatprep.subr.mxu0 0.0
  %1201 = vmatpush1.msra.mxu0 %v236
  %1202 = vmatprep.subr.mxu0 0.0
  %1203 = vmatpush1.msra.mxu0 %v239
  %1204 = vmatprep.subr.mxu0 0.0
  %1205 = vmatpush1.msra.mxu0 %v242
  %1206 = vmatprep.subr.mxu0 0.0
  %1207 = vmatpush1.msra.mxu0 %v245
  %1208 = vmatprep.subr.mxu0 0.0
  %1209 = vmatpush1.msra.mxu0 %v248
  %1210 = vmatprep.subr.mxu0 0.0
  %1211 = vmatpush1.msra.mxu0 %v251
  %1212 = vmatprep.subr.mxu0 0.0
  %1213 = vmatpush1.msra.mxu0 %v254
  %1214 = vmatprep.subr.mxu0 0.0
  %1215 = vmatpush1.msra.mxu0 0.0
  %1216 = vmatprep.subr.mxu0 0.0
  %1217 = vmatpush1.msra.mxu0 0.0
  %1218 = vmatprep.subr.mxu0 0.0
  %1219 = vmatpush1.msra.mxu0 0.0
  %1220 = vmatprep.subr.mxu0 0.0
  %1221 = vmatpush1.msra.mxu0 0.0
  %1222 = vmatprep.subr.mxu0 0.0
  %1223 = vmatpush1.msra.mxu0 0.0
  %1224 = vmatprep.subr.mxu0 0.0
  %1225 = vmatpush1.msra.mxu0 0.0
  %1226 = vmatprep.subr.mxu0 0.0
  %1227 = vmatpush1.msra.mxu0 0.0
  %1228 = vmatprep.subr.mxu0 0.0
  %1229 = vmatpush1.msra.mxu0 0.0
  %1230 = vmatprep.subr.mxu0 0.0
  %1231 = vmatpush1.msra.mxu0 0.0
  %1232 = vmatprep.subr.mxu0 0.0
  %1233 = vmatpush1.msra.mxu0 0.0
  %1234 = vmatprep.subr.mxu0 0.0
  %1235 = vmatpush1.msra.mxu0 0.0
  %1236 = vmatprep.subr.mxu0 0.0
  %1237 = vmatpush1.msra.mxu0 0.0
  %1238 = vmatprep.subr.mxu0 0.0
  %1239 = vmatpush1.msra.mxu0 0.0
  %1240 = vmatprep.subr.mxu0 0.0
  %1241 = vmatpush1.msra.mxu0 0.0
  %1242 = vmatprep.subr.mxu0 0.0
  %1243 = vmatpush1.msra.mxu0 0.0
  %1244 = vmatprep.subr.mxu0 0.0
  %1245 = vmatpush1.msra.mxu0 0.0
  %1246 = vmatprep.mubr.f32.mxu0 0.0
  %1247 = vmatmul.mubr.f32.gmra.mrb[0].mxu0 %v1109
  %v1248 = vpop.f32.mrb[0].mxu0
  %v1249 = vadd.f32 0.0, %v1248
  %v1250 = vpop.f32.mrb[0].mxu0
  %1251 = vdwg.mxu0
  %s1252 = scalar_lea.vmem [#allocation3], 5
  %v1253 = vld [vmem:[%s1252] ss:$8 sm:$0x7]
  %v1254 = vadd.f32 %v1253, %v1178
  %v1255 = vxor.u32 %v1254, 2147483648
  %v1256 = vmul.f32 %v1255, 1.442695
  %v1257 = vpow.pop %v1256
  %v1258 = vadd.f32 %v1257, 1.0
  %v1259 = vrcp.pop %v1258
  %v1260 = vmul.f32 1.0, %v1259
  %v1262 = vrot.slane %v1253, 1
  %v1264 = vadd.f32 %v1262, %v1180
  %v1265 = vxor.u32 %v1264, 2147483648
  %v1266 = vmul.f32 %v1265, 1.442695
  %v1267 = vpow.pop %v1266
  %v1268 = vadd.f32 %v1267, 1.0
  %v1269 = vrcp.pop %v1268
  %v1270 = vmul.f32 1.0, %v1269
  %v1271 = vadd.f32 %v1249, %v255
  %v1272 = vmul.f32 %v1260, %v1271
  %v1273 = vrot.slane %v1253, 2
  %v1275 = vadd.f32 %v1273, %v1272
  %v1276 = vtanh.pop %v1275
  %v1277 = vsub.f32 1.0, %v1270
  %v1278 = vmul.f32 %v1277, %v1276
  %v1279 = vmul.f32 %v1270, %v1109
  %v1280 = vadd.f32 %v1278, %v1279
  %1281 = vst [vmem:[%s6 + $0x5] sm:$0x1] %v1280
  %1282 = vmatprep.subr.mxu0 %v208
  %1283 = vmatpush1.msra.mxu0 %v207
  %1284 = vmatprep.subr.mxu0 %v211
  %1285 = vmatpush1.msra.mxu0 %v210
  %1286 = vmatprep.subr.mxu0 %v214
  %1287 = vmatpush1.msra.mxu0 %v213
  %1288 = vmatprep.subr.mxu0 %v217
  %1289 = vmatpush1.msra.mxu0 %v216
  %1290 = vmatprep.subr.mxu0 %v220
  %1291 = vmatpush1.msra.mxu0 %v219
  %1292 = vmatprep.subr.mxu0 %v223
  %1293 = vmatpush1.msra.mxu0 %v222
  %1294 = vmatprep.subr.mxu0 %v226
  %1295 = vmatpush1.msra.mxu0 %v225
  %1296 = vmatprep.subr.mxu0 %v229
  %1297 = vmatpush1.msra.mxu0 %v228
  %1298 = vmatprep.subr.mxu0 %v232
  %1299 = vmatpush1.msra.mxu0 %v231
  %1300 = vmatprep.subr.mxu0 %v235
  %1301 = vmatpush1.msra.mxu0 %v234
  %1302 = vmatprep.subr.mxu0 %v238
  %1303 = vmatpush1.msra.mxu0 %v237
  %1304 = vmatprep.subr.mxu0 %v241
  %1305 = vmatpush1.msra.mxu0 %v240
  %1306 = vmatprep.subr.mxu0 %v244
  %1307 = vmatpush1.msra.mxu0 %v243
  %1308 = vmatprep.subr.mxu0 %v247
  %1309 = vmatpush1.msra.mxu0 %v246
  %1310 = vmatprep.subr.mxu0 %v250
  %1311 = vmatpush1.msra.mxu0 %v249
  %1312 = vmatprep.subr.mxu0 %v253
  %1313 = vmatpush1.msra.mxu0 %v252
  %1314 = vmatprep.subr.mxu0 0.0
  %1315 = vmatpush1.msra.mxu0 0.0
  %1316 = vmatprep.subr.mxu0 0.0
  %1317 = vmatpush1.msra.mxu0 0.0
  %1318 = vmatprep.subr.mxu0 0.0
  %1319 = vmatpush1.msra.mxu0 0.0
  %1320 = vmatprep.subr.mxu0 0.0
  %1321 = vmatpush1.msra.mxu0 0.0
  %1322 = vmatprep.subr.mxu0 0.0
  %1323 = vmatpush1.msra.mxu0 0.0
  %1324 = vmatprep.subr.mxu0 0.0
  %1325 = vmatpush1.msra.mxu0 0.0
  %1326 = vmatprep.subr.mxu0 0.0
  %1327 = vmatpush1.msra.mxu0 0.0
  %1328 = vmatprep.subr.mxu0 0.0
  %1329 = vmatpush1.msra.mxu0 0.0
  %1330 = vmatprep.subr.mxu0 0.0
  %1331 = vmatpush1.msra.mxu0 0.0
  %1332 = vmatprep.subr.mxu0 0.0
  %1333 = vmatpush1.msra.mxu0 0.0
  %1334 = vmatprep.subr.mxu0 0.0
  %1335 = vmatpush1.msra.mxu0 0.0
  %1336 = vmatprep.subr.mxu0 0.0
  %1337 = vmatpush1.msra.mxu0 0.0
  %1338 = vmatprep.subr.mxu0 0.0
  %1339 = vmatpush1.msra.mxu0 0.0
  %1340 = vmatprep.subr.mxu0 0.0
  %1341 = vmatpush1.msra.mxu0 0.0
  %1342 = vmatprep.subr.mxu0 0.0
  %1343 = vmatpush1.msra.mxu0 0.0
  %1344 = vmatprep.subr.mxu0 0.0
  %1345 = vmatpush1.msra.mxu0 0.0
  %1346 = vmatprep.mubr.f32.mxu0 0.0
  %1347 = vmatmul.mubr.f32.gmra.mrb[0].mxu0 %v1280
  %v1348 = vpop.f32.mrb[0].mxu0
  %v1349 = vadd.f32 0.0, %v1348
  %v1350 = vpop.f32.mrb[0].mxu0
  %v1351 = vadd.f32 0.0, %v1350
  %1352 = vdwg.mxu0
  %1353 = vmatprep.subr.mxu0 0.0
  %1354 = vmatpush1.msra.mxu0 %v209
  %1355 = vmatprep.subr.mxu0 0.0
  %1356 = vmatpush1.msra.mxu0 %v212
  %1357 = vmatprep.subr.mxu0 0.0
  %1358 = vmatpush1.msra.mxu0 %v215
  %1359 = vmatprep.subr.mxu0 0.0
  %1360 = vmatpush1.msra.mxu0 %v218
  %1361 = vmatprep.subr.mxu0 0.0
  %1362 = vmatpush1.msra.mxu0 %v221
  %1363 = vmatprep.subr.mxu0 0.0
  %1364 = vmatpush1.msra.mxu0 %v224
  %1365 = vmatprep.subr.mxu0 0.0
  %1366 = vmatpush1.msra.mxu0 %v227
  %1367 = vmatprep.subr.mxu0 0.0
  %1368 = vmatpush1.msra.mxu0 %v230
  %1369 = vmatprep.subr.mxu0 0.0
  %1370 = vmatpush1.msra.mxu0 %v233
  %1371 = vmatprep.subr.mxu0 0.0
  %1372 = vmatpush1.msra.mxu0 %v236
  %1373 = vmatprep.subr.mxu0 0.0
  %1374 = vmatpush1.msra.mxu0 %v239
  %1375 = vmatprep.subr.mxu0 0.0
  %1376 = vmatpush1.msra.mxu0 %v242
  %1377 = vmatprep.subr.mxu0 0.0
  %1378 = vmatpush1.msra.mxu0 %v245
  %1379 = vmatprep.subr.mxu0 0.0
  %1380 = vmatpush1.msra.mxu0 %v248
  %1381 = vmatprep.subr.mxu0 0.0
  %1382 = vmatpush1.msra.mxu0 %v251
  %1383 = vmatprep.subr.mxu0 0.0
  %1384 = vmatpush1.msra.mxu0 %v254
  %1385 = vmatprep.subr.mxu0 0.0
  %1386 = vmatpush1.msra.mxu0 0.0
  %1387 = vmatprep.subr.mxu0 0.0
  %1388 = vmatpush1.msra.mxu0 0.0
  %1389 = vmatprep.subr.mxu0 0.0
  %1390 = vmatpush1.msra.mxu0 0.0
  %1391 = vmatprep.subr.mxu0 0.0
  %1392 = vmatpush1.msra.mxu0 0.0
  %1393 = vmatprep.subr.mxu0 0.0
  %1394 = vmatpush1.msra.mxu0 0.0
  %1395 = vmatprep.subr.mxu0 0.0
  %1396 = vmatpush1.msra.mxu0 0.0
  %1397 = vmatprep.subr.mxu0 0.0
  %1398 = vmatpush1.msra.mxu0 0.0
  %1399 = vmatprep.subr.mxu0 0.0
  %1400 = vmatpush1.msra.mxu0 0.0
  %1401 = vmatprep.subr.mxu0 0.0
  %1402 = vmatpush1.msra.mxu0 0.0
  %1403 = vmatprep.subr.mxu0 0.0
  %1404 = vmatpush1.msra.mxu0 0.0
  %1405 = vmatprep.subr.mxu0 0.0
  %1406 = vmatpush1.msra.mxu0 0.0
  %1407 = vmatprep.subr.mxu0 0.0
  %1408 = vmatpush1.msra.mxu0 0.0
  %1409 = vmatprep.subr.mxu0 0.0
  %1410 = vmatpush1.msra.mxu0 0.0
  %1411 = vmatprep.subr.mxu0 0.0
  %1412 = vmatpush1.msra.mxu0 0.0
  %1413 = vmatprep.subr.mxu0 0.0
  %1414 = vmatpush1.msra.mxu0 0.0
  %1415 = vmatprep.subr.mxu0 0.0
  %1416 = vmatpush1.msra.mxu0 0.0
  %1417 = vmatprep.mubr.f32.mxu0 0.0
  %1418 = vmatmul.mubr.f32.gmra.mrb[0].mxu0 %v1280
  %v1419 = vpop.f32.mrb[0].mxu0
  %v1420 = vadd.f32 0.0, %v1419
  %v1421 = vpop.f32.mrb[0].mxu0
  %1422 = vdwg.mxu0
  %s1423 = scalar_lea.vmem [#allocation3], 6
  %v1424 = vld [vmem:[%s1423] ss:$8 sm:$0x7]
  %v1425 = vadd.f32 %v1424, %v1349
  %v1426 = vxor.u32 %v1425, 2147483648
  %v1427 = vmul.f32 %v1426, 1.442695
  %v1428 = vpow.pop %v1427
  %v1429 = vadd.f32 %v1428, 1.0
  %v1430 = vrcp.pop %v1429
  %v1431 = vmul.f32 1.0, %v1430
  %v1433 = vrot.slane %v1424, 1
  %v1435 = vadd.f32 %v1433, %v1351
  %v1436 = vxor.u32 %v1435, 2147483648
  %v1437 = vmul.f32 %v1436, 1.442695
  %v1438 = vpow.pop %v1437
  %v1439 = vadd.f32 %v1438, 1.0
  %v1440 = vrcp.pop %v1439
  %v1441 = vmul.f32 1.0, %v1440
  %v1442 = vadd.f32 %v1420, %v255
  %v1443 = vmul.f32 %v1431, %v1442
  %v1444 = vrot.slane %v1424, 2
  %v1446 = vadd.f32 %v1444, %v1443
  %v1447 = vtanh.pop %v1446
  %v1448 = vsub.f32 1.0, %v1441
  %v1449 = vmul.f32 %v1448, %v1447
  %v1450 = vmul.f32 %v1441, %v1280
  %v1451 = vadd.f32 %v1449, %v1450
  %1452 = vst [vmem:[%s6 + $0x6] sm:$0x1] %v1451
  %1453 = vmatprep.subr.mxu0 %v208
  %1454 = vmatpush1.msra.mxu0 %v207
  %1455 = vmatprep.subr.mxu0 %v211
  %1456 = vmatpush1.msra.mxu0 %v210
  %1457 = vmatprep.subr.mxu0 %v214
  %1458 = vmatpush1.msra.mxu0 %v213
  %1459 = vmatprep.subr.mxu0 %v217
  %1460 = vmatpush1.msra.mxu0 %v216
  %1461 = vmatprep.subr.mxu0 %v220
  %1462 = vmatpush1.msra.mxu0 %v219
  %1463 = vmatprep.subr.mxu0 %v223
  %1464 = vmatpush1.msra.mxu0 %v222
  %1465 = vmatprep.subr.mxu0 %v226
  %1466 = vmatpush1.msra.mxu0 %v225
  %1467 = vmatprep.subr.mxu0 %v229
  %1468 = vmatpush1.msra.mxu0 %v228
  %1469 = vmatprep.subr.mxu0 %v232
  %1470 = vmatpush1.msra.mxu0 %v231
  %1471 = vmatprep.subr.mxu0 %v235
  %1472 = vmatpush1.msra.mxu0 %v234
  %1473 = vmatprep.subr.mxu0 %v238
  %1474 = vmatpush1.msra.mxu0 %v237
  %1475 = vmatprep.subr.mxu0 %v241
  %1476 = vmatpush1.msra.mxu0 %v240
  %1477 = vmatprep.subr.mxu0 %v244
  %1478 = vmatpush1.msra.mxu0 %v243
  %1479 = vmatprep.subr.mxu0 %v247
  %1480 = vmatpush1.msra.mxu0 %v246
  %1481 = vmatprep.subr.mxu0 %v250
  %1482 = vmatpush1.msra.mxu0 %v249
  %1483 = vmatprep.subr.mxu0 %v253
  %1484 = vmatpush1.msra.mxu0 %v252
  %1485 = vmatprep.subr.mxu0 0.0
  %1486 = vmatpush1.msra.mxu0 0.0
  %1487 = vmatprep.subr.mxu0 0.0
  %1488 = vmatpush1.msra.mxu0 0.0
  %1489 = vmatprep.subr.mxu0 0.0
  %1490 = vmatpush1.msra.mxu0 0.0
  %1491 = vmatprep.subr.mxu0 0.0
  %1492 = vmatpush1.msra.mxu0 0.0
  %1493 = vmatprep.subr.mxu0 0.0
  %1494 = vmatpush1.msra.mxu0 0.0
  %1495 = vmatprep.subr.mxu0 0.0
  %1496 = vmatpush1.msra.mxu0 0.0
  %1497 = vmatprep.subr.mxu0 0.0
  %1498 = vmatpush1.msra.mxu0 0.0
  %1499 = vmatprep.subr.mxu0 0.0
  %1500 = vmatpush1.msra.mxu0 0.0
  %1501 = vmatprep.subr.mxu0 0.0
  %1502 = vmatpush1.msra.mxu0 0.0
  %1503 = vmatprep.subr.mxu0 0.0
  %1504 = vmatpush1.msra.mxu0 0.0
  %1505 = vmatprep.subr.mxu0 0.0
  %1506 = vmatpush1.msra.mxu0 0.0
  %1507 = vmatprep.subr.mxu0 0.0
  %1508 = vmatpush1.msra.mxu0 0.0
  %1509 = vmatprep.subr.mxu0 0.0
  %1510 = vmatpush1.msra.mxu0 0.0
  %1511 = vmatprep.subr.mxu0 0.0
  %1512 = vmatpush1.msra.mxu0 0.0
  %1513 = vmatprep.subr.mxu0 0.0
  %1514 = vmatpush1.msra.mxu0 0.0
  %1515 = vmatprep.subr.mxu0 0.0
  %1516 = vmatpush1.msra.mxu0 0.0
  %1517 = vmatprep.mubr.f32.mxu0 0.0
  %1518 = vmatmul.mubr.f32.gmra.mrb[0].mxu0 %v1451
  %v1519 = vpop.f32.mrb[0].mxu0
  %v1520 = vadd.f32 0.0, %v1519
  %v1521 = vpop.f32.mrb[0].mxu0
  %v1522 = vadd.f32 0.0, %v1521
  %1523 = vdwg.mxu0
  %1524 = vmatprep.subr.mxu0 0.0
  %1525 = vmatpush1.msra.mxu0 %v209
  %1526 = vmatprep.subr.mxu0 0.0
  %1527 = vmatpush1.msra.mxu0 %v212
  %1528 = vmatprep.subr.mxu0 0.0
  %1529 = vmatpush1.msra.mxu0 %v215
  %1530 = vmatprep.subr.mxu0 0.0
  %1531 = vmatpush1.msra.mxu0 %v218
  %1532 = vmatprep.subr.mxu0 0.0
  %1533 = vmatpush1.msra.mxu0 %v221
  %1534 = vmatprep.subr.mxu0 0.0
  %1535 = vmatpush1.msra.mxu0 %v224
  %1536 = vmatprep.subr.mxu0 0.0
  %1537 = vmatpush1.msra.mxu0 %v227
  %1538 = vmatprep.subr.mxu0 0.0
  %1539 = vmatpush1.msra.mxu0 %v230
  %1540 = vmatprep.subr.mxu0 0.0
  %1541 = vmatpush1.msra.mxu0 %v233
  %1542 = vmatprep.subr.mxu0 0.0
  %1543 = vmatpush1.msra.mxu0 %v236
  %1544 = vmatprep.subr.mxu0 0.0
  %1545 = vmatpush1.msra.mxu0 %v239
  %1546 = vmatprep.subr.mxu0 0.0
  %1547 = vmatpush1.msra.mxu0 %v242
  %1548 = vmatprep.subr.mxu0 0.0
  %1549 = vmatpush1.msra.mxu0 %v245
  %1550 = vmatprep.subr.mxu0 0.0
  %1551 = vmatpush1.msra.mxu0 %v248
  %1552 = vmatprep.subr.mxu0 0.0
  %1553 = vmatpush1.msra.mxu0 %v251
  %1554 = vmatprep.subr.mxu0 0.0
  %1555 = vmatpush1.msra.mxu0 %v254
  %1556 = vmatprep.subr.mxu0 0.0
  %1557 = vmatpush1.msra.mxu0 0.0
  %1558 = vmatprep.subr.mxu0 0.0
  %1559 = vmatpush1.msra.mxu0 0.0
  %1560 = vmatprep.subr.mxu0 0.0
  %1561 = vmatpush1.msra.mxu0 0.0
  %1562 = vmatprep.subr.mxu0 0.0
  %1563 = vmatpush1.msra.mxu0 0.0
  %1564 = vmatprep.subr.mxu0 0.0
  %1565 = vmatpush1.msra.mxu0 0.0
  %1566 = vmatprep.subr.mxu0 0.0
  %1567 = vmatpush1.msra.mxu0 0.0
  %1568 = vmatprep.subr.mxu0 0.0
  %1569 = vmatpush1.msra.mxu0 0.0
  %1570 = vmatprep.subr.mxu0 0.0
  %1571 = vmatpush1.msra.mxu0 0.0
  %1572 = vmatprep.subr.mxu0 0.0
  %1573 = vmatpush1.msra.mxu0 0.0
  %1574 = vmatprep.subr.mxu0 0.0
  %1575 = vmatpush1.msra.mxu0 0.0
  %1576 = vmatprep.subr.mxu0 0.0
  %1577 = vmatpush1.msra.mxu0 0.0
  %1578 = vmatprep.subr.mxu0 0.0
  %1579 = vmatpush1.msra.mxu0 0.0
  %1580 = vmatprep.subr.mxu0 0.0
  %1581 = vmatpush1.msra.mxu0 0.0
  %1582 = vmatprep.subr.mxu0 0.0
  %1583 = vmatpush1.msra.mxu0 0.0
  %1584 = vmatprep.subr.mxu0 0.0
  %1585 = vmatpush1.msra.mxu0 0.0
  %1586 = vmatprep.subr.mxu0 0.0
  %1587 = vmatpush1.msra.mxu0 0.0
  %1588 = vmatprep.mubr.f32.mxu0 0.0
  %1589 = vmatmul.mubr.f32.gmra.mrb[0].mxu0 %v1451
  %v1590 = vpop.f32.mrb[0].mxu0
  %v1591 = vadd.f32 0.0, %v1590
  %v1592 = vpop.f32.mrb[0].mxu0
  %1593 = vdwg.mxu0
  %s1594 = scalar_lea.vmem [#allocation3], 7
  %v1595 = vld [vmem:[%s1594] ss:$8 sm:$0x7]
  %v1596 = vadd.f32 %v1595, %v1520
  %v1597 = vxor.u32 %v1596, 2147483648
  %v1598 = vmul.f32 %v1597, 1.442695
  %v1599 = vpow.pop %v1598
  %v1600 = vadd.f32 %v1599, 1.0
  %v1601 = vrcp.pop %v1600
  %v1602 = vmul.f32 1.0, %v1601
  %v1604 = vrot.slane %v1595, 1
  %v1606 = vadd.f32 %v1604, %v1522
  %v1607 = vxor.u32 %v1606, 2147483648
  %v1608 = vmul.f32 %v1607, 1.442695
  %v1609 = vpow.pop %v1608
  %v1610 = vadd.f32 %v1609, 1.0
  %v1611 = vrcp.pop %v1610
  %v1612 = vmul.f32 1.0, %v1611
  %v1613 = vadd.f32 %v1591, %v255
  %v1614 = vmul.f32 %v1602, %v1613
  %v1615 = vrot.slane %v1595, 2
  %v1617 = vadd.f32 %v1615, %v1614
  %v1618 = vtanh.pop %v1617
  %v1619 = vsub.f32 1.0, %v1612
  %v1620 = vmul.f32 %v1619, %v1618
  %v1621 = vmul.f32 %v1612, %v1451
  %v1622 = vadd.f32 %v1620, %v1621
  %1623 = vst [vmem:[%s6 + $0x7] sm:$0x1] %v1622
  %1624 = vst [vmem:[#allocation2] sm:$0x1] %v1622
  // Predicated region
  $region30: #{encoder_rnn_forward.1} parent=0 // pred_check
    _
  $region31: #{encoder_rnn_forward.1} parent=0 // pred_check_branch
    %1626 = sbr.rel (0) target = $region33
  $region32: #{encoder_rnn_forward.1} parent=0 // pred_region
    _
  $region33: #{encoder_rnn_forward.1} parent=0 // pred_fallthru
    _
  // Predicated region
  $region34: #{encoder_rnn_forward.1} parent=0 // pred_check
    _
  $region35: #{encoder_rnn_forward.1} parent=0 // pred_check_branch
    %1628 = sbr.rel (0) target = $region37
  $region36: #{encoder_rnn_forward.1} parent=0 // pred_region
    _
  $region37: #{encoder_rnn_forward.1} parent=0 // pred_fallthru
    _

</llo_original>
